<compile_context>
chip_gen: v7x
topology: tpu7x:2x2x1
jax: 0.10.0
libtpu: 0.0.40
codegen_flags: <defaults>
</compile_context>

<pallas_src>
import functools

import jax
import jax.numpy as jnp
from jax import lax
from jax.experimental import pallas as pl
from jax.experimental.pallas import tpu as pltpu

# ------------------------- config (synthetic, small) -------------------------
VOCAB_SIZE = 256
HIDDEN = 128            # multiple of 128 -> lane-dense output stores
PAD_TOKEN_ID = 0
LAYER_NORM_EPS = 1e-12
BATCH = 2
SEQ = 32

# Tables at or below this many bytes are kept VMEM-resident (safe headroom even
# on v7x's 64 MiB VMEM); larger tables use the HBM per-row DMA gather.
_VMEM_TABLE_LIMIT = 24 * 1024 * 1024


def _round_up(x, m):
    return (x + m - 1) // m * m


def _layer_norm(x, gamma, beta, eps):
    """Vectorized one-pass LayerNorm over the last dim of a (rows, H) f32 slab.

    gamma / beta stay (1, H): they broadcast for free in the VALU; a
    materialized (rows, H) copy would blow the 64-vreg file at BERT sizes.
    """
    inv_h = 1.0 / x.shape[-1]                       # compile-time constant
    s1 = jnp.sum(x, axis=-1, keepdims=True)
    s2 = jnp.sum(x * x, axis=-1, keepdims=True)
    mu = s1 * inv_h
    var = jnp.maximum(s2 * inv_h - mu * mu, 0.0)    # one-pass var can dip < 0
    inv = lax.rsqrt(var + eps)
    return (x - mu) * inv * gamma + beta


# ----------------------- path A: table stays in HBM --------------------------
def _hbm_gather_kernel(chunk, n_chunks, n_slots, eps,
                       ids_ref,      # SMEM scalar prefetch: (n_pad,) int32
                       emb_hbm,      # ANY/HBM: (V, H) f32 (never copied whole)
                       gamma_ref,    # VMEM: (1, H) f32
                       beta_ref,     # VMEM: (1, H) f32
                       out_ref,      # VMEM: (tok_tile, H) f32
                       stage,        # VMEM scratch: (n_slots, chunk, H) f32
                       sem):         # DMA semaphores: (n_slots,)
    tok_tile = chunk * n_chunks
    base = pl.multiple_of(pl.program_id(0) * tok_tile, tok_tile)
    gamma = gamma_ref[...]           # (1, H), deliberately NOT broadcast
    beta = beta_ref[...]

    def start_chunk(c, slot):
        # Static unroll: LLO co-issues SMEM id loads, address math (scalar
        # slots) and DMA descriptor pushes (misc slot) across iterations.
        for t in range(chunk):
            tok = ids_ref[base + c * chunk + t]
            pltpu.make_async_copy(
                emb_hbm.at[pl.ds(tok, 1)],         # (1, H) row in HBM
                stage.at[slot, pl.ds(t, 1)],       # (1, H) row in VMEM
                sem.at[slot],
            ).start()

    def wait_chunk(slot):
        # Single aggregated wait: this descriptor covers (chunk, H) = chunk*H*4
        # bytes, exactly the sum of the `chunk` row copies signalled on this
        # slot's semaphore -> one wait instead of `chunk` scalar waits.
        pltpu.make_async_copy(
            emb_hbm.at[pl.ds(0, chunk)],
            stage.at[slot],
            sem.at[slot],
        ).wait()

    # Prime the n_slots-deep pipeline. Done every grid step so each step is
    # self-contained and the token axis can stay "parallel" (v7x 2-TC split).
    for c in range(min(n_slots - 1, n_chunks)):
        start_chunk(c, c % n_slots)

    for c in range(n_chunks):                       # static unroll (small)
        slot = c % n_slots
        nxt = c + n_slots - 1
        if nxt < n_chunks:
            # Issue the look-ahead chunk (SMEM id reads + DMA starts) *before*
            # waiting: keeps gathers in flight and keeps scalar reads ahead of
            # the wait (a .wait() breaks SMEM sst->sld forwarding).
            start_chunk(nxt, nxt % n_slots)
        wait_chunk(slot)

        x = stage[slot]                             # (chunk, H) f32
        out_ref[pl.ds(c * chunk, chunk), :] = _layer_norm(x, gamma, beta, eps)


# ------------------- path B: table resident in VMEM --------------------------
def _vmem_gather_kernel(tok_tile, eps,
                        ids_ref,     # SMEM scalar prefetch: (n_pad,) int32
                        tab_ref,     # VMEM: (V, H) f32, resident across steps
                        gamma_ref,   # VMEM: (1, H) f32
                        beta_ref,    # VMEM: (1, H) f32
                        out_ref):    # VMEM: (tok_tile, H) f32
    base = pl.multiple_of(pl.program_id(0) * tok_tile, tok_tile)
    # Pure vld/vst gather from the VMEM-resident table: no DMA descriptors,
    # no semaphores. Rows land directly in the output tile, then one
    # vectorized LayerNorm over the whole lane-dense (tok_tile, H) slab.
    for t in range(tok_tile):                       # static unroll
        tok = ids_ref[base + t]
        out_ref[pl.ds(t, 1), :] = tab_ref[pl.ds(tok, 1), :]
    out_ref[...] = _layer_norm(out_ref[...], gamma_ref[...], beta_ref[...], eps)


# --------------------------------- wrapper -----------------------------------
@functools.partial(jax.jit,
                   static_argnames=("eps", "tok_tile", "chunk", "num_slots",
                                    "table_in_vmem"))
def embeddings_forward(input_ids, word_emb, gamma, beta, *,
                       eps=LAYER_NORM_EPS, tok_tile=512, chunk=64,
                       num_slots=4, table_in_vmem=None):
    """input_ids: (B, S) int -> (B, S, H) float32 (inference-mode dropout)."""
    B, S = input_ids.shape
    V, H = word_emb.shape
    assert H % 128 == 0, "hidden size must be a multiple of 128 (lane-dense)"
    n_tok = B * S

    # Clamp ids so an out-of-range id can never become an OOB gather.
    # (PyTorch would raise for OOB ids; we clamp instead.)
    ids = jnp.clip(input_ids.reshape(n_tok).astype(jnp.int32), 0, V - 1)

    # Tile sizing: chunk multiple of 8 (sublanes), tok_tile multiple of chunk,
    # token count padded up to a tile multiple (pad ids with the valid row 0).
    chunk = _round_up(max(8, min(chunk, tok_tile)), 8)
    tok_tile = _round_up(min(tok_tile, _round_up(n_tok, chunk)), chunk)
    n_chunks = tok_tile // chunk
    n_pad = _round_up(n_tok, tok_tile)
    if n_pad != n_tok:
        ids = jnp.pad(ids, (0, n_pad - n_tok))
    grid = (n_pad // tok_tile,)

    table = word_emb.astype(jnp.float32)
    gamma2 = gamma.reshape(1, H).astype(jnp.float32)
    beta2 = beta.reshape(1, H).astype(jnp.float32)

    table_bytes = V * H * 4
    out_tile_bytes = tok_tile * H * 4
    if table_in_vmem is None:
        table_in_vmem = table_bytes <= _VMEM_TABLE_LIMIT

    if table_in_vmem:
        # Small table: one streaming HBM->VMEM DMA (reused across all grid
        # steps via the constant index_map) + in-VMEM dynamic row reads.
        kernel = functools.partial(_vmem_gather_kernel, tok_tile, float(eps))
        in_specs = [
            pl.BlockSpec((V, H), lambda i, _ids: (0, 0)),     # whole table
            pl.BlockSpec((1, H), lambda i, _ids: (0, 0)),     # gamma
            pl.BlockSpec((1, H), lambda i, _ids: (0, 0)),     # beta
        ]
        scratch_shapes = []
        vmem_needed = table_bytes + 2 * out_tile_bytes
    else:
        # Large table: leave it in HBM; gather rows with a num_slots-deep
        # double-buffered per-row DMA pipeline.
        assert V >= chunk, "aggregated wait descriptor slices table rows [0,chunk)"
        n_slots = max(1, min(num_slots, n_chunks))
        kernel = functools.partial(_hbm_gather_kernel, chunk, n_chunks,
                                   n_slots, float(eps))
        in_specs = [
            pl.BlockSpec(memory_space=pl.ANY),                # table in HBM
            pl.BlockSpec((1, H), lambda i, _ids: (0, 0)),     # gamma
            pl.BlockSpec((1, H), lambda i, _ids: (0, 0)),     # beta
        ]
        scratch_shapes = [
            pltpu.VMEM((n_slots, chunk, H), jnp.float32),     # gather staging
            pltpu.SemaphoreType.DMA((n_slots,)),
        ]
        vmem_needed = n_slots * chunk * H * 4 + 2 * out_tile_bytes

    out_flat = pl.pallas_call(
        kernel,
        out_shape=jax.ShapeDtypeStruct((n_pad, H), jnp.float32),
        grid_spec=pltpu.PrefetchScalarGridSpec(
            num_scalar_prefetch=1,                            # token ids -> SMEM
            grid=grid,
            in_specs=in_specs,
            out_specs=pl.BlockSpec((tok_tile, H), lambda i, _ids: (i, 0)),
            scratch_shapes=scratch_shapes,
        ),
        compiler_params=pltpu.CompilerParams(
            dimension_semantics=("parallel",),                # steps independent
            vmem_limit_bytes=int(min(100 * 1024 * 1024,
                                     vmem_needed + 8 * 1024 * 1024)),
        ),
    )(ids, table, gamma2, beta2)

    return out_flat[:n_tok].reshape(B, S, H)


# -------------------------------- reference ----------------------------------
def _reference(input_ids, word_emb, gamma, beta):
    x = word_emb[input_ids]                                   # (B, S, H)
    mu = jnp.mean(x, axis=-1, keepdims=True)
    var = jnp.mean((x - mu) ** 2, axis=-1, keepdims=True)
    return (x - mu) / jnp.sqrt(var + LAYER_NORM_EPS) * gamma + beta


if __name__ == "__main__":
    key = jax.random.PRNGKey(0)
    k_emb, k_g, k_b, k_ids = jax.random.split(key, 4)

    # nn.Embedding ~ N(0,1); padding row zeroed (padding_idx).
    word_emb = jax.random.normal(k_emb, (VOCAB_SIZE, HIDDEN), jnp.float32)
    word_emb = word_emb.at[PAD_TOKEN_ID].set(0.0)
    # LayerNorm params near torch init but perturbed so they participate.
    gamma = jnp.ones((HIDDEN,), jnp.float32) + 0.01 * jax.random.normal(
        k_g, (HIDDEN,), jnp.float32)
    beta = 0.01 * jax.random.normal(k_b, (HIDDEN,), jnp.float32)

    input_ids = jax.random.randint(k_ids, (BATCH, SEQ), 0, VOCAB_SIZE,
                                   dtype=jnp.int32)

    ref = _reference(input_ids, word_emb, gamma, beta)

    # Small tiles so the multi-step grid, the 4-deep DMA gather pipeline and
    # the VMEM-resident path are all exercised (real sizes: 512 / 64).
    out_hbm = embeddings_forward(input_ids, word_emb, gamma, beta,
                                 tok_tile=32, chunk=8, num_slots=4,
                                 table_in_vmem=False)
    out_hbm = jax.block_until_ready(out_hbm)
    assert out_hbm.shape == (BATCH, SEQ, HIDDEN)
    err_hbm = float(jnp.max(jnp.abs(out_hbm - ref)))
    assert err_hbm < 1e-4, err_hbm

    out_vmem = embeddings_forward(input_ids, word_emb, gamma, beta,
                                  tok_tile=32, chunk=8, table_in_vmem=True)
    out_vmem = jax.block_until_ready(out_vmem)
    assert out_vmem.shape == (BATCH, SEQ, HIDDEN)
    err_vmem = float(jnp.max(jnp.abs(out_vmem - ref)))
    assert err_vmem < 1e-4, err_vmem

    print("KERNEL_OK")
</pallas_src>

<mosaic_0001>
module attributes {stable_mosaic.version = 11 : i64} {
  func.func @_hbm_gather_kernel(%arg0: i32, %arg1: memref<64xi32, #tpu.memory_space<smem>>, %arg2: memref<256x128xf32, #tpu.memory_space<any>>, %arg3: memref<1x128xf32, #tpu.memory_space<vmem>>, %arg4: memref<1x128xf32, #tpu.memory_space<vmem>>, %arg5: memref<32x128xf32, #tpu.memory_space<vmem>>, %arg6: memref<4x8x128xf32, #tpu.memory_space<vmem>>, %arg7: memref<4x!tpu.dma_semaphore, #tpu.memory_space<semaphore_mem>>) attributes {dimension_semantics = [#tpu.dimension_semantics<parallel>], iteration_bounds = array<i64: 2>, scalar_prefetch = 1 : i64, scratch_operands = 2 : i64, tpu.core_type = #tpu.core_type<tc>, window_params = [{}, {pipeline_mode = #tpu.pipeline_mode<synchronous>, transform_indices = @transform_1, window_bounds = array<i64: 1, 128>}, {pipeline_mode = #tpu.pipeline_mode<synchronous>, transform_indices = @transform_2, window_bounds = array<i64: 1, 128>}, {transform_indices = @transform_3, window_bounds = array<i64: 32, 128>}]} {
    %c32_i32 = arith.constant 32 : i32
    %0 = arith.muli %arg0, %c32_i32 : i32
    %1 = tpu.assume_multiple %0, 32 : i32
    %c0 = arith.constant 0 : index
    %c0_0 = arith.constant 0 : index
    %2 = vector.load %arg3[%c0, %c0_0] : memref<1x128xf32, #tpu.memory_space<vmem>>, vector<1x128xf32>
    %c0_1 = arith.constant 0 : index
    %c0_2 = arith.constant 0 : index
    %3 = vector.load %arg4[%c0_1, %c0_2] : memref<1x128xf32, #tpu.memory_space<vmem>>, vector<1x128xf32>
    %c0_i32 = arith.constant 0 : i32
    %4 = arith.addi %1, %c0_i32 : i32
    %c0_i32_3 = arith.constant 0 : i32
    %5 = arith.addi %4, %c0_i32_3 : i32
    %6 = arith.index_cast %5 : i32 to index
    %7 = memref.load %arg1[%6] : memref<64xi32, #tpu.memory_space<smem>>
    %c0_i32_4 = arith.constant 0 : i32
    %c0_i32_5 = arith.constant 0 : i32
    %c0_i32_6 = arith.constant 0 : i32
    %8 = tpu.memref_slice %arg2[%7, %c0_i32_6] : memref<256x128xf32, #tpu.memory_space<any>> -> memref<1x128xf32, #tpu.memory_space<any>>
    %c0_i32_7 = arith.constant 0 : i32
    %c0_i32_8 = arith.constant 0 : i32
    %9 = tpu.memref_slice %arg6[%c0_i32_4, %c0_i32_7, %c0_i32_8] : memref<4x8x128xf32, #tpu.memory_space<vmem>> -> memref<1x1x128xf32, #tpu.memory_space<vmem>>
    %10 = tpu.memref_squeeze %9 : memref<1x1x128xf32, #tpu.memory_space<vmem>> -> memref<1x128xf32, #tpu.memory_space<vmem>>
    %11 = tpu.memref_slice %arg7[%c0_i32_5] : memref<4x!tpu.dma_semaphore, #tpu.memory_space<semaphore_mem>> -> memref<1x!tpu.dma_semaphore, #tpu.memory_space<semaphore_mem>>
    %12 = tpu.memref_squeeze %11 : memref<1x!tpu.dma_semaphore, #tpu.memory_space<semaphore_mem>> -> memref<!tpu.dma_semaphore, #tpu.memory_space<semaphore_mem>>
    tpu.enqueue_dma source(%8 : memref<1x128xf32, #tpu.memory_space<any>>) target(%10 : memref<1x128xf32, #tpu.memory_space<vmem>>) target_semaphore(%12 : memref<!tpu.dma_semaphore, #tpu.memory_space<semaphore_mem>>)
    %c0_i32_9 = arith.constant 0 : i32
    %13 = arith.addi %1, %c0_i32_9 : i32
    %c1_i32 = arith.constant 1 : i32
    %14 = arith.addi %13, %c1_i32 : i32
    %15 = arith.index_cast %14 : i32 to index
    %16 = memref.load %arg1[%15] : memref<64xi32, #tpu.memory_space<smem>>
    %c0_i32_10 = arith.constant 0 : i32
    %c0_i32_11 = arith.constant 0 : i32
    %c0_i32_12 = arith.constant 0 : i32
    %17 = tpu.memref_slice %arg2[%16, %c0_i32_12] : memref<256x128xf32, #tpu.memory_space<any>> -> memref<1x128xf32, #tpu.memory_space<any>>
    %c1_i32_13 = arith.constant 1 : i32
    %c0_i32_14 = arith.constant 0 : i32
    %18 = tpu.memref_slice %arg6[%c0_i32_10, %c1_i32_13, %c0_i32_14] : memref<4x8x128xf32, #tpu.memory_space<vmem>> -> memref<1x1x128xf32, #tpu.memory_space<vmem>>
    %19 = tpu.memref_squeeze %18 : memref<1x1x128xf32, #tpu.memory_space<vmem>> -> memref<1x128xf32, #tpu.memory_space<vmem>>
    %20 = tpu.memref_slice %arg7[%c0_i32_11] : memref<4x!tpu.dma_semaphore, #tpu.memory_space<semaphore_mem>> -> memref<1x!tpu.dma_semaphore, #tpu.memory_space<semaphore_mem>>
    %21 = tpu.memref_squeeze %20 : memref<1x!tpu.dma_semaphore, #tpu.memory_space<semaphore_mem>> -> memref<!tpu.dma_semaphore, #tpu.memory_space<semaphore_mem>>
    tpu.enqueue_dma source(%17 : memref<1x128xf32, #tpu.memory_space<any>>) target(%19 : memref<1x128xf32, #tpu.memory_space<vmem>>) target_semaphore(%21 : memref<!tpu.dma_semaphore, #tpu.memory_space<semaphore_mem>>)
    %c0_i32_15 = arith.constant 0 : i32
    %22 = arith.addi %1, %c0_i32_15 : i32
    %c2_i32 = arith.constant 2 : i32
    %23 = arith.addi %22, %c2_i32 : i32
    %24 = arith.index_cast %23 : i32 to index
    %25 = memref.load %arg1[%24] : memref<64xi32, #tpu.memory_space<smem>>
    %c0_i32_16 = arith.constant 0 : i32
    %c0_i32_17 = arith.constant 0 : i32
    %c0_i32_18 = arith.constant 0 : i32
    %26 = tpu.memref_slice %arg2[%25, %c0_i32_18] : memref<256x128xf32, #tpu.memory_space<any>> -> memref<1x128xf32, #tpu.memory_space<any>>
    %c2_i32_19 = arith.constant 2 : i32
    %c0_i32_20 = arith.constant 0 : i32
    %27 = tpu.memref_slice %arg6[%c0_i32_16, %c2_i32_19, %c0_i32_20] : memref<4x8x128xf32, #tpu.memory_space<vmem>> -> memref<1x1x128xf32, #tpu.memory_space<vmem>>
    %28 = tpu.memref_squeeze %27 : memref<1x1x128xf32, #tpu.memory_space<vmem>> -> memref<1x128xf32, #tpu.memory_space<vmem>>
    %29 = tpu.memref_slice %arg7[%c0_i32_17] : memref<4x!tpu.dma_semaphore, #tpu.memory_space<semaphore_mem>> -> memref<1x!tpu.dma_semaphore, #tpu.memory_space<semaphore_mem>>
    %30 = tpu.memref_squeeze %29 : memref<1x!tpu.dma_semaphore, #tpu.memory_space<semaphore_mem>> -> memref<!tpu.dma_semaphore, #tpu.memory_space<semaphore_mem>>
    tpu.enqueue_dma source(%26 : memref<1x128xf32, #tpu.memory_space<any>>) target(%28 : memref<1x128xf32, #tpu.memory_space<vmem>>) target_semaphore(%30 : memref<!tpu.dma_semaphore, #tpu.memory_space<semaphore_mem>>)
    %c0_i32_21 = arith.constant 0 : i32
    %31 = arith.addi %1, %c0_i32_21 : i32
    %c3_i32 = arith.constant 3 : i32
    %32 = arith.addi %31, %c3_i32 : i32
    %33 = arith.index_cast %32 : i32 to index
    %34 = memref.load %arg1[%33] : memref<64xi32, #tpu.memory_space<smem>>
    %c0_i32_22 = arith.constant 0 : i32
    %c0_i32_23 = arith.constant 0 : i32
    %c0_i32_24 = arith.constant 0 : i32
    %35 = tpu.memref_slice %arg2[%34, %c0_i32_24] : memref<256x128xf32, #tpu.memory_space<any>> -> memref<1x128xf32, #tpu.memory_space<any>>
    %c3_i32_25 = arith.constant 3 : i32
    %c0_i32_26 = arith.constant 0 : i32
    %36 = tpu.memref_slice %arg6[%c0_i32_22, %c3_i32_25, %c0_i32_26] : memref<4x8x128xf32, #tpu.memory_space<vmem>> -> memref<1x1x128xf32, #tpu.memory_space<vmem>>
    %37 = tpu.memref_squeeze %36 : memref<1x1x128xf32, #tpu.memory_space<vmem>> -> memref<1x128xf32, #tpu.memory_space<vmem>>
    %38 = tpu.memref_slice %arg7[%c0_i32_23] : memref<4x!tpu.dma_semaphore, #tpu.memory_space<semaphore_mem>> -> memref<1x!tpu.dma_semaphore, #tpu.memory_space<semaphore_mem>>
    %39 = tpu.memref_squeeze %38 : memref<1x!tpu.dma_semaphore, #tpu.memory_space<semaphore_mem>> -> memref<!tpu.dma_semaphore, #tpu.memory_space<semaphore_mem>>
    tpu.enqueue_dma source(%35 : memref<1x128xf32, #tpu.memory_space<any>>) target(%37 : memref<1x128xf32, #tpu.memory_space<vmem>>) target_semaphore(%39 : memref<!tpu.dma_semaphore, #tpu.memory_space<semaphore_mem>>)
    %c0_i32_27 = arith.constant 0 : i32
    %40 = arith.addi %1, %c0_i32_27 : i32
    %c4_i32 = arith.constant 4 : i32
    %41 = arith.addi %40, %c4_i32 : i32
    %42 = arith.index_cast %41 : i32 to index
    %43 = memref.load %arg1[%42] : memref<64xi32, #tpu.memory_space<smem>>
    %c0_i32_28 = arith.constant 0 : i32
    %c0_i32_29 = arith.constant 0 : i32
    %c0_i32_30 = arith.constant 0 : i32
    %44 = tpu.memref_slice %arg2[%43, %c0_i32_30] : memref<256x128xf32, #tpu.memory_space<any>> -> memref<1x128xf32, #tpu.memory_space<any>>
    %c4_i32_31 = arith.constant 4 : i32
    %c0_i32_32 = arith.constant 0 : i32
    %45 = tpu.memref_slice %arg6[%c0_i32_28, %c4_i32_31, %c0_i32_32] : memref<4x8x128xf32, #tpu.memory_space<vmem>> -> memref<1x1x128xf32, #tpu.memory_space<vmem>>
    %46 = tpu.memref_squeeze %45 : memref<1x1x128xf32, #tpu.memory_space<vmem>> -> memref<1x128xf32, #tpu.memory_space<vmem>>
    %47 = tpu.memref_slice %arg7[%c0_i32_29] : memref<4x!tpu.dma_semaphore, #tpu.memory_space<semaphore_mem>> -> memref<1x!tpu.dma_semaphore, #tpu.memory_space<semaphore_mem>>
    %48 = tpu.memref_squeeze %47 : memref<1x!tpu.dma_semaphore, #tpu.memory_space<semaphore_mem>> -> memref<!tpu.dma_semaphore, #tpu.memory_space<semaphore_mem>>
    tpu.enqueue_dma source(%44 : memref<1x128xf32, #tpu.memory_space<any>>) target(%46 : memref<1x128xf32, #tpu.memory_space<vmem>>) target_semaphore(%48 : memref<!tpu.dma_semaphore, #tpu.memory_space<semaphore_mem>>)
    %c0_i32_33 = arith.constant 0 : i32
    %49 = arith.addi %1, %c0_i32_33 : i32
    %c5_i32 = arith.constant 5 : i32
    %50 = arith.addi %49, %c5_i32 : i32
    %51 = arith.index_cast %50 : i32 to index
    %52 = memref.load %arg1[%51] : memref<64xi32, #tpu.memory_space<smem>>
    %c0_i32_34 = arith.constant 0 : i32
    %c0_i32_35 = arith.constant 0 : i32
    %c0_i32_36 = arith.constant 0 : i32
    %53 = tpu.memref_slice %arg2[%52, %c0_i32_36] : memref<256x128xf32, #tpu.memory_space<any>> -> memref<1x128xf32, #tpu.memory_space<any>>
    %c5_i32_37 = arith.constant 5 : i32
    %c0_i32_38 = arith.constant 0 : i32
    %54 = tpu.memref_slice %arg6[%c0_i32_34, %c5_i32_37, %c0_i32_38] : memref<4x8x128xf32, #tpu.memory_space<vmem>> -> memref<1x1x128xf32, #tpu.memory_space<vmem>>
    %55 = tpu.memref_squeeze %54 : memref<1x1x128xf32, #tpu.memory_space<vmem>> -> memref<1x128xf32, #tpu.memory_space<vmem>>
    %56 = tpu.memref_slice %arg7[%c0_i32_35] : memref<4x!tpu.dma_semaphore, #tpu.memory_space<semaphore_mem>> -> memref<1x!tpu.dma_semaphore, #tpu.memory_space<semaphore_mem>>
    %57 = tpu.memref_squeeze %56 : memref<1x!tpu.dma_semaphore, #tpu.memory_space<semaphore_mem>> -> memref<!tpu.dma_semaphore, #tpu.memory_space<semaphore_mem>>
    tpu.enqueue_dma source(%53 : memref<1x128xf32, #tpu.memory_space<any>>) target(%55 : memref<1x128xf32, #tpu.memory_space<vmem>>) target_semaphore(%57 : memref<!tpu.dma_semaphore, #tpu.memory_space<semaphore_mem>>)
    %c0_i32_39 = arith.constant 0 : i32
    %58 = arith.addi %1, %c0_i32_39 : i32
    %c6_i32 = arith.constant 6 : i32
    %59 = arith.addi %58, %c6_i32 : i32
    %60 = arith.index_cast %59 : i32 to index
    %61 = memref.load %arg1[%60] : memref<64xi32, #tpu.memory_space<smem>>
    %c0_i32_40 = arith.constant 0 : i32
    %c0_i32_41 = arith.constant 0 : i32
    %c0_i32_42 = arith.constant 0 : i32
    %62 = tpu.memref_slice %arg2[%61, %c0_i32_42] : memref<256x128xf32, #tpu.memory_space<any>> -> memref<1x128xf32, #tpu.memory_space<any>>
    %c6_i32_43 = arith.constant 6 : i32
    %c0_i32_44 = arith.constant 0 : i32
    %63 = tpu.memref_slice %arg6[%c0_i32_40, %c6_i32_43, %c0_i32_44] : memref<4x8x128xf32, #tpu.memory_space<vmem>> -> memref<1x1x128xf32, #tpu.memory_space<vmem>>
    %64 = tpu.memref_squeeze %63 : memref<1x1x128xf32, #tpu.memory_space<vmem>> -> memref<1x128xf32, #tpu.memory_space<vmem>>
    %65 = tpu.memref_slice %arg7[%c0_i32_41] : memref<4x!tpu.dma_semaphore, #tpu.memory_space<semaphore_mem>> -> memref<1x!tpu.dma_semaphore, #tpu.memory_space<semaphore_mem>>
    %66 = tpu.memref_squeeze %65 : memref<1x!tpu.dma_semaphore, #tpu.memory_space<semaphore_mem>> -> memref<!tpu.dma_semaphore, #tpu.memory_space<semaphore_mem>>
    tpu.enqueue_dma source(%62 : memref<1x128xf32, #tpu.memory_space<any>>) target(%64 : memref<1x128xf32, #tpu.memory_space<vmem>>) target_semaphore(%66 : memref<!tpu.dma_semaphore, #tpu.memory_space<semaphore_mem>>)
    %c0_i32_45 = arith.constant 0 : i32
    %67 = arith.addi %1, %c0_i32_45 : i32
    %c7_i32 = arith.constant 7 : i32
    %68 = arith.addi %67, %c7_i32 : i32
    %69 = arith.index_cast %68 : i32 to index
    %70 = memref.load %arg1[%69] : memref<64xi32, #tpu.memory_space<smem>>
    %c0_i32_46 = arith.constant 0 : i32
    %c0_i32_47 = arith.constant 0 : i32
    %c0_i32_48 = arith.constant 0 : i32
    %71 = tpu.memref_slice %arg2[%70, %c0_i32_48] : memref<256x128xf32, #tpu.memory_space<any>> -> memref<1x128xf32, #tpu.memory_space<any>>
    %c7_i32_49 = arith.constant 7 : i32
    %c0_i32_50 = arith.constant 0 : i32
    %72 = tpu.memref_slice %arg6[%c0_i32_46, %c7_i32_49, %c0_i32_50] : memref<4x8x128xf32, #tpu.memory_space<vmem>> -> memref<1x1x128xf32, #tpu.memory_space<vmem>>
    %73 = tpu.memref_squeeze %72 : memref<1x1x128xf32, #tpu.memory_space<vmem>> -> memref<1x128xf32, #tpu.memory_space<vmem>>
    %74 = tpu.memref_slice %arg7[%c0_i32_47] : memref<4x!tpu.dma_semaphore, #tpu.memory_space<semaphore_mem>> -> memref<1x!tpu.dma_semaphore, #tpu.memory_space<semaphore_mem>>
    %75 = tpu.memref_squeeze %74 : memref<1x!tpu.dma_semaphore, #tpu.memory_space<semaphore_mem>> -> memref<!tpu.dma_semaphore, #tpu.memory_space<semaphore_mem>>
    tpu.enqueue_dma source(%71 : memref<1x128xf32, #tpu.memory_space<any>>) target(%73 : memref<1x128xf32, #tpu.memory_space<vmem>>) target_semaphore(%75 : memref<!tpu.dma_semaphore, #tpu.memory_space<semaphore_mem>>)
    %c8_i32 = arith.constant 8 : i32
    %76 = arith.addi %1, %c8_i32 : i32
    %c0_i32_51 = arith.constant 0 : i32
    %77 = arith.addi %76, %c0_i32_51 : i32
    %78 = arith.index_cast %77 : i32 to index
    %79 = memref.load %arg1[%78] : memref<64xi32, #tpu.memory_space<smem>>
    %c1_i32_52 = arith.constant 1 : i32
    %c1_i32_53 = arith.constant 1 : i32
    %c0_i32_54 = arith.constant 0 : i32
    %80 = tpu.memref_slice %arg2[%79, %c0_i32_54] : memref<256x128xf32, #tpu.memory_space<any>> -> memref<1x128xf32, #tpu.memory_space<any>>
    %c0_i32_55 = arith.constant 0 : i32
    %c0_i32_56 = arith.constant 0 : i32
    %81 = tpu.memref_slice %arg6[%c1_i32_52, %c0_i32_55, %c0_i32_56] : memref<4x8x128xf32, #tpu.memory_space<vmem>> -> memref<1x1x128xf32, #tpu.memory_space<vmem>>
    %82 = tpu.memref_squeeze %81 : memref<1x1x128xf32, #tpu.memory_space<vmem>> -> memref<1x128xf32, #tpu.memory_space<vmem>>
    %83 = tpu.memref_slice %arg7[%c1_i32_53] : memref<4x!tpu.dma_semaphore, #tpu.memory_space<semaphore_mem>> -> memref<1x!tpu.dma_semaphore, #tpu.memory_space<semaphore_mem>>
    %84 = tpu.memref_squeeze %83 : memref<1x!tpu.dma_semaphore, #tpu.memory_space<semaphore_mem>> -> memref<!tpu.dma_semaphore, #tpu.memory_space<semaphore_mem>>
    tpu.enqueue_dma source(%80 : memref<1x128xf32, #tpu.memory_space<any>>) target(%82 : memref<1x128xf32, #tpu.memory_space<vmem>>) target_semaphore(%84 : memref<!tpu.dma_semaphore, #tpu.memory_space<semaphore_mem>>)
    %c8_i32_57 = arith.constant 8 : i32
    %85 = arith.addi %1, %c8_i32_57 : i32
    %c1_i32_58 = arith.constant 1 : i32
    %86 = arith.addi %85, %c1_i32_58 : i32
    %87 = arith.index_cast %86 : i32 to index
    %88 = memref.load %arg1[%87] : memref<64xi32, #tpu.memory_space<smem>>
    %c1_i32_59 = arith.constant 1 : i32
    %c1_i32_60 = arith.constant 1 : i32
    %c0_i32_61 = arith.constant 0 : i32
    %89 = tpu.memref_slice %arg2[%88, %c0_i32_61] : memref<256x128xf32, #tpu.memory_space<any>> -> memref<1x128xf32, #tpu.memory_space<any>>
    %c1_i32_62 = arith.constant 1 : i32
    %c0_i32_63 = arith.constant 0 : i32
    %90 = tpu.memref_slice %arg6[%c1_i32_59, %c1_i32_62, %c0_i32_63] : memref<4x8x128xf32, #tpu.memory_space<vmem>> -> memref<1x1x128xf32, #tpu.memory_space<vmem>>
    %91 = tpu.memref_squeeze %90 : memref<1x1x128xf32, #tpu.memory_space<vmem>> -> memref<1x128xf32, #tpu.memory_space<vmem>>
    %92 = tpu.memref_slice %arg7[%c1_i32_60] : memref<4x!tpu.dma_semaphore, #tpu.memory_space<semaphore_mem>> -> memref<1x!tpu.dma_semaphore, #tpu.memory_space<semaphore_mem>>
    %93 = tpu.memref_squeeze %92 : memref<1x!tpu.dma_semaphore, #tpu.memory_space<semaphore_mem>> -> memref<!tpu.dma_semaphore, #tpu.memory_space<semaphore_mem>>
    tpu.enqueue_dma source(%89 : memref<1x128xf32, #tpu.memory_space<any>>) target(%91 : memref<1x128xf32, #tpu.memory_space<vmem>>) target_semaphore(%93 : memref<!tpu.dma_semaphore, #tpu.memory_space<semaphore_mem>>)
    %c8_i32_64 = arith.constant 8 : i32
    %94 = arith.addi %1, %c8_i32_64 : i32
    %c2_i32_65 = arith.constant 2 : i32
    %95 = arith.addi %94, %c2_i32_65 : i32
    %96 = arith.index_cast %95 : i32 to index
    %97 = memref.load %arg1[%96] : memref<64xi32, #tpu.memory_space<smem>>
    %c1_i32_66 = arith.constant 1 : i32
    %c1_i32_67 = arith.constant 1 : i32
    %c0_i32_68 = arith.constant 0 : i32
    %98 = tpu.memref_slice %arg2[%97, %c0_i32_68] : memref<256x128xf32, #tpu.memory_space<any>> -> memref<1x128xf32, #tpu.memory_space<any>>
    %c2_i32_69 = arith.constant 2 : i32
    %c0_i32_70 = arith.constant 0 : i32
    %99 = tpu.memref_slice %arg6[%c1_i32_66, %c2_i32_69, %c0_i32_70] : memref<4x8x128xf32, #tpu.memory_space<vmem>> -> memref<1x1x128xf32, #tpu.memory_space<vmem>>
    %100 = tpu.memref_squeeze %99 : memref<1x1x128xf32, #tpu.memory_space<vmem>> -> memref<1x128xf32, #tpu.memory_space<vmem>>
    %101 = tpu.memref_slice %arg7[%c1_i32_67] : memref<4x!tpu.dma_semaphore, #tpu.memory_space<semaphore_mem>> -> memref<1x!tpu.dma_semaphore, #tpu.memory_space<semaphore_mem>>
    %102 = tpu.memref_squeeze %101 : memref<1x!tpu.dma_semaphore, #tpu.memory_space<semaphore_mem>> -> memref<!tpu.dma_semaphore, #tpu.memory_space<semaphore_mem>>
    tpu.enqueue_dma source(%98 : memref<1x128xf32, #tpu.memory_space<any>>) target(%100 : memref<1x128xf32, #tpu.memory_space<vmem>>) target_semaphore(%102 : memref<!tpu.dma_semaphore, #tpu.memory_space<semaphore_mem>>)
    %c8_i32_71 = arith.constant 8 : i32
    %103 = arith.addi %1, %c8_i32_71 : i32
    %c3_i32_72 = arith.constant 3 : i32
    %104 = arith.addi %103, %c3_i32_72 : i32
    %105 = arith.index_cast %104 : i32 to index
    %106 = memref.load %arg1[%105] : memref<64xi32, #tpu.memory_space<smem>>
    %c1_i32_73 = arith.constant 1 : i32
    %c1_i32_74 = arith.constant 1 : i32
    %c0_i32_75 = arith.constant 0 : i32
    %107 = tpu.memref_slice %arg2[%106, %c0_i32_75] : memref<256x128xf32, #tpu.memory_space<any>> -> memref<1x128xf32, #tpu.memory_space<any>>
    %c3_i32_76 = arith.constant 3 : i32
    %c0_i32_77 = arith.constant 0 : i32
    %108 = tpu.memref_slice %arg6[%c1_i32_73, %c3_i32_76, %c0_i32_77] : memref<4x8x128xf32, #tpu.memory_space<vmem>> -> memref<1x1x128xf32, #tpu.memory_space<vmem>>
    %109 = tpu.memref_squeeze %108 : memref<1x1x128xf32, #tpu.memory_space<vmem>> -> memref<1x128xf32, #tpu.memory_space<vmem>>
    %110 = tpu.memref_slice %arg7[%c1_i32_74] : memref<4x!tpu.dma_semaphore, #tpu.memory_space<semaphore_mem>> -> memref<1x!tpu.dma_semaphore, #tpu.memory_space<semaphore_mem>>
    %111 = tpu.memref_squeeze %110 : memref<1x!tpu.dma_semaphore, #tpu.memory_space<semaphore_mem>> -> memref<!tpu.dma_semaphore, #tpu.memory_space<semaphore_mem>>
    tpu.enqueue_dma source(%107 : memref<1x128xf32, #tpu.memory_space<any>>) target(%109 : memref<1x128xf32, #tpu.memory_space<vmem>>) target_semaphore(%111 : memref<!tpu.dma_semaphore, #tpu.memory_space<semaphore_mem>>)
    %c8_i32_78 = arith.constant 8 : i32
    %112 = arith.addi %1, %c8_i32_78 : i32
    %c4_i32_79 = arith.constant 4 : i32
    %113 = arith.addi %112, %c4_i32_79 : i32
    %114 = arith.index_cast %113 : i32 to index
    %115 = memref.load %arg1[%114] : memref<64xi32, #tpu.memory_space<smem>>
    %c1_i32_80 = arith.constant 1 : i32
    %c1_i32_81 = arith.constant 1 : i32
    %c0_i32_82 = arith.constant 0 : i32
    %116 = tpu.memref_slice %arg2[%115, %c0_i32_82] : memref<256x128xf32, #tpu.memory_space<any>> -> memref<1x128xf32, #tpu.memory_space<any>>
    %c4_i32_83 = arith.constant 4 : i32
    %c0_i32_84 = arith.constant 0 : i32
    %117 = tpu.memref_slice %arg6[%c1_i32_80, %c4_i32_83, %c0_i32_84] : memref<4x8x128xf32, #tpu.memory_space<vmem>> -> memref<1x1x128xf32, #tpu.memory_space<vmem>>
    %118 = tpu.memref_squeeze %117 : memref<1x1x128xf32, #tpu.memory_space<vmem>> -> memref<1x128xf32, #tpu.memory_space<vmem>>
    %119 = tpu.memref_slice %arg7[%c1_i32_81] : memref<4x!tpu.dma_semaphore, #tpu.memory_space<semaphore_mem>> -> memref<1x!tpu.dma_semaphore, #tpu.memory_space<semaphore_mem>>
    %120 = tpu.memref_squeeze %119 : memref<1x!tpu.dma_semaphore, #tpu.memory_space<semaphore_mem>> -> memref<!tpu.dma_semaphore, #tpu.memory_space<semaphore_mem>>
    tpu.enqueue_dma source(%116 : memref<1x128xf32, #tpu.memory_space<any>>) target(%118 : memref<1x128xf32, #tpu.memory_space<vmem>>) target_semaphore(%120 : memref<!tpu.dma_semaphore, #tpu.memory_space<semaphore_mem>>)
    %c8_i32_85 = arith.constant 8 : i32
    %121 = arith.addi %1, %c8_i32_85 : i32
    %c5_i32_86 = arith.constant 5 : i32
    %122 = arith.addi %121, %c5_i32_86 : i32
    %123 = arith.index_cast %122 : i32 to index
    %124 = memref.load %arg1[%123] : memref<64xi32, #tpu.memory_space<smem>>
    %c1_i32_87 = arith.constant 1 : i32
    %c1_i32_88 = arith.constant 1 : i32
    %c0_i32_89 = arith.constant 0 : i32
    %125 = tpu.memref_slice %arg2[%124, %c0_i32_89] : memref<256x128xf32, #tpu.memory_space<any>> -> memref<1x128xf32, #tpu.memory_space<any>>
    %c5_i32_90 = arith.constant 5 : i32
    %c0_i32_91 = arith.constant 0 : i32
    %126 = tpu.memref_slice %arg6[%c1_i32_87, %c5_i32_90, %c0_i32_91] : memref<4x8x128xf32, #tpu.memory_space<vmem>> -> memref<1x1x128xf32, #tpu.memory_space<vmem>>
    %127 = tpu.memref_squeeze %126 : memref<1x1x128xf32, #tpu.memory_space<vmem>> -> memref<1x128xf32, #tpu.memory_space<vmem>>
    %128 = tpu.memref_slice %arg7[%c1_i32_88] : memref<4x!tpu.dma_semaphore, #tpu.memory_space<semaphore_mem>> -> memref<1x!tpu.dma_semaphore, #tpu.memory_space<semaphore_mem>>
    %129 = tpu.memref_squeeze %128 : memref<1x!tpu.dma_semaphore, #tpu.memory_space<semaphore_mem>> -> memref<!tpu.dma_semaphore, #tpu.memory_space<semaphore_mem>>
    tpu.enqueue_dma source(%125 : memref<1x128xf32, #tpu.memory_space<any>>) target(%127 : memref<1x128xf32, #tpu.memory_space<vmem>>) target_semaphore(%129 : memref<!tpu.dma_semaphore, #tpu.memory_space<semaphore_mem>>)
    %c8_i32_92 = arith.constant 8 : i32
    %130 = arith.addi %1, %c8_i32_92 : i32
    %c6_i32_93 = arith.constant 6 : i32
    %131 = arith.addi %130, %c6_i32_93 : i32
    %132 = arith.index_cast %131 : i32 to index
    %133 = memref.load %arg1[%132] : memref<64xi32, #tpu.memory_space<smem>>
    %c1_i32_94 = arith.constant 1 : i32
    %c1_i32_95 = arith.constant 1 : i32
    %c0_i32_96 = arith.constant 0 : i32
    %134 = tpu.memref_slice %arg2[%133, %c0_i32_96] : memref<256x128xf32, #tpu.memory_space<any>> -> memref<1x128xf32, #tpu.memory_space<any>>
    %c6_i32_97 = arith.constant 6 : i32
    %c0_i32_98 = arith.constant 0 : i32
    %135 = tpu.memref_slice %arg6[%c1_i32_94, %c6_i32_97, %c0_i32_98] : memref<4x8x128xf32, #tpu.memory_space<vmem>> -> memref<1x1x128xf32, #tpu.memory_space<vmem>>
    %136 = tpu.memref_squeeze %135 : memref<1x1x128xf32, #tpu.memory_space<vmem>> -> memref<1x128xf32, #tpu.memory_space<vmem>>
    %137 = tpu.memref_slice %arg7[%c1_i32_95] : memref<4x!tpu.dma_semaphore, #tpu.memory_space<semaphore_mem>> -> memref<1x!tpu.dma_semaphore, #tpu.memory_space<semaphore_mem>>
    %138 = tpu.memref_squeeze %137 : memref<1x!tpu.dma_semaphore, #tpu.memory_space<semaphore_mem>> -> memref<!tpu.dma_semaphore, #tpu.memory_space<semaphore_mem>>
    tpu.enqueue_dma source(%134 : memref<1x128xf32, #tpu.memory_space<any>>) target(%136 : memref<1x128xf32, #tpu.memory_space<vmem>>) target_semaphore(%138 : memref<!tpu.dma_semaphore, #tpu.memory_space<semaphore_mem>>)
    %c8_i32_99 = arith.constant 8 : i32
    %139 = arith.addi %1, %c8_i32_99 : i32
    %c7_i32_100 = arith.constant 7 : i32
    %140 = arith.addi %139, %c7_i32_100 : i32
    %141 = arith.index_cast %140 : i32 to index
    %142 = memref.load %arg1[%141] : memref<64xi32, #tpu.memory_space<smem>>
    %c1_i32_101 = arith.constant 1 : i32
    %c1_i32_102 = arith.constant 1 : i32
    %c0_i32_103 = arith.constant 0 : i32
    %143 = tpu.memref_slice %arg2[%142, %c0_i32_103] : memref<256x128xf32, #tpu.memory_space<any>> -> memref<1x128xf32, #tpu.memory_space<any>>
    %c7_i32_104 = arith.constant 7 : i32
    %c0_i32_105 = arith.constant 0 : i32
    %144 = tpu.memref_slice %arg6[%c1_i32_101, %c7_i32_104, %c0_i32_105] : memref<4x8x128xf32, #tpu.memory_space<vmem>> -> memref<1x1x128xf32, #tpu.memory_space<vmem>>
    %145 = tpu.memref_squeeze %144 : memref<1x1x128xf32, #tpu.memory_space<vmem>> -> memref<1x128xf32, #tpu.memory_space<vmem>>
    %146 = tpu.memref_slice %arg7[%c1_i32_102] : memref<4x!tpu.dma_semaphore, #tpu.memory_space<semaphore_mem>> -> memref<1x!tpu.dma_semaphore, #tpu.memory_space<semaphore_mem>>
    %147 = tpu.memref_squeeze %146 : memref<1x!tpu.dma_semaphore, #tpu.memory_space<semaphore_mem>> -> memref<!tpu.dma_semaphore, #tpu.memory_space<semaphore_mem>>
    tpu.enqueue_dma source(%143 : memref<1x128xf32, #tpu.memory_space<any>>) target(%145 : memref<1x128xf32, #tpu.memory_space<vmem>>) target_semaphore(%147 : memref<!tpu.dma_semaphore, #tpu.memory_space<semaphore_mem>>)
    %c16_i32 = arith.constant 16 : i32
    %148 = arith.addi %1, %c16_i32 : i32
    %c0_i32_106 = arith.constant 0 : i32
    %149 = arith.addi %148, %c0_i32_106 : i32
    %150 = arith.index_cast %149 : i32 to index
    %151 = memref.load %arg1[%150] : memref<64xi32, #tpu.memory_space<smem>>
    %c2_i32_107 = arith.constant 2 : i32
    %c2_i32_108 = arith.constant 2 : i32
    %c0_i32_109 = arith.constant 0 : i32
    %152 = tpu.memref_slice %arg2[%151, %c0_i32_109] : memref<256x128xf32, #tpu.memory_space<any>> -> memref<1x128xf32, #tpu.memory_space<any>>
    %c0_i32_110 = arith.constant 0 : i32
    %c0_i32_111 = arith.constant 0 : i32
    %153 = tpu.memref_slice %arg6[%c2_i32_107, %c0_i32_110, %c0_i32_111] : memref<4x8x128xf32, #tpu.memory_space<vmem>> -> memref<1x1x128xf32, #tpu.memory_space<vmem>>
    %154 = tpu.memref_squeeze %153 : memref<1x1x128xf32, #tpu.memory_space<vmem>> -> memref<1x128xf32, #tpu.memory_space<vmem>>
    %155 = tpu.memref_slice %arg7[%c2_i32_108] : memref<4x!tpu.dma_semaphore, #tpu.memory_space<semaphore_mem>> -> memref<1x!tpu.dma_semaphore, #tpu.memory_space<semaphore_mem>>
    %156 = tpu.memref_squeeze %155 : memref<1x!tpu.dma_semaphore, #tpu.memory_space<semaphore_mem>> -> memref<!tpu.dma_semaphore, #tpu.memory_space<semaphore_mem>>
    tpu.enqueue_dma source(%152 : memref<1x128xf32, #tpu.memory_space<any>>) target(%154 : memref<1x128xf32, #tpu.memory_space<vmem>>) target_semaphore(%156 : memref<!tpu.dma_semaphore, #tpu.memory_space<semaphore_mem>>)
    %c16_i32_112 = arith.constant 16 : i32
    %157 = arith.addi %1, %c16_i32_112 : i32
    %c1_i32_113 = arith.constant 1 : i32
    %158 = arith.addi %157, %c1_i32_113 : i32
    %159 = arith.index_cast %158 : i32 to index
    %160 = memref.load %arg1[%159] : memref<64xi32, #tpu.memory_space<smem>>
    %c2_i32_114 = arith.constant 2 : i32
    %c2_i32_115 = arith.constant 2 : i32
    %c0_i32_116 = arith.constant 0 : i32
    %161 = tpu.memref_slice %arg2[%160, %c0_i32_116] : memref<256x128xf32, #tpu.memory_space<any>> -> memref<1x128xf32, #tpu.memory_space<any>>
    %c1_i32_117 = arith.constant 1 : i32
    %c0_i32_118 = arith.constant 0 : i32
    %162 = tpu.memref_slice %arg6[%c2_i32_114, %c1_i32_117, %c0_i32_118] : memref<4x8x128xf32, #tpu.memory_space<vmem>> -> memref<1x1x128xf32, #tpu.memory_space<vmem>>
    %163 = tpu.memref_squeeze %162 : memref<1x1x128xf32, #tpu.memory_space<vmem>> -> memref<1x128xf32, #tpu.memory_space<vmem>>
    %164 = tpu.memref_slice %arg7[%c2_i32_115] : memref<4x!tpu.dma_semaphore, #tpu.memory_space<semaphore_mem>> -> memref<1x!tpu.dma_semaphore, #tpu.memory_space<semaphore_mem>>
    %165 = tpu.memref_squeeze %164 : memref<1x!tpu.dma_semaphore, #tpu.memory_space<semaphore_mem>> -> memref<!tpu.dma_semaphore, #tpu.memory_space<semaphore_mem>>
    tpu.enqueue_dma source(%161 : memref<1x128xf32, #tpu.memory_space<any>>) target(%163 : memref<1x128xf32, #tpu.memory_space<vmem>>) target_semaphore(%165 : memref<!tpu.dma_semaphore, #tpu.memory_space<semaphore_mem>>)
    %c16_i32_119 = arith.constant 16 : i32
    %166 = arith.addi %1, %c16_i32_119 : i32
    %c2_i32_120 = arith.constant 2 : i32
    %167 = arith.addi %166, %c2_i32_120 : i32
    %168 = arith.index_cast %167 : i32 to index
    %169 = memref.load %arg1[%168] : memref<64xi32, #tpu.memory_space<smem>>
    %c2_i32_121 = arith.constant 2 : i32
    %c2_i32_122 = arith.constant 2 : i32
    %c0_i32_123 = arith.constant 0 : i32
    %170 = tpu.memref_slice %arg2[%169, %c0_i32_123] : memref<256x128xf32, #tpu.memory_space<any>> -> memref<1x128xf32, #tpu.memory_space<any>>
    %c2_i32_124 = arith.constant 2 : i32
    %c0_i32_125 = arith.constant 0 : i32
    %171 = tpu.memref_slice %arg6[%c2_i32_121, %c2_i32_124, %c0_i32_125] : memref<4x8x128xf32, #tpu.memory_space<vmem>> -> memref<1x1x128xf32, #tpu.memory_space<vmem>>
    %172 = tpu.memref_squeeze %171 : memref<1x1x128xf32, #tpu.memory_space<vmem>> -> memref<1x128xf32, #tpu.memory_space<vmem>>
    %173 = tpu.memref_slice %arg7[%c2_i32_122] : memref<4x!tpu.dma_semaphore, #tpu.memory_space<semaphore_mem>> -> memref<1x!tpu.dma_semaphore, #tpu.memory_space<semaphore_mem>>
    %174 = tpu.memref_squeeze %173 : memref<1x!tpu.dma_semaphore, #tpu.memory_space<semaphore_mem>> -> memref<!tpu.dma_semaphore, #tpu.memory_space<semaphore_mem>>
    tpu.enqueue_dma source(%170 : memref<1x128xf32, #tpu.memory_space<any>>) target(%172 : memref<1x128xf32, #tpu.memory_space<vmem>>) target_semaphore(%174 : memref<!tpu.dma_semaphore, #tpu.memory_space<semaphore_mem>>)
    %c16_i32_126 = arith.constant 16 : i32
    %175 = arith.addi %1, %c16_i32_126 : i32
    %c3_i32_127 = arith.constant 3 : i32
    %176 = arith.addi %175, %c3_i32_127 : i32
    %177 = arith.index_cast %176 : i32 to index
    %178 = memref.load %arg1[%177] : memref<64xi32, #tpu.memory_space<smem>>
    %c2_i32_128 = arith.constant 2 : i32
    %c2_i32_129 = arith.constant 2 : i32
    %c0_i32_130 = arith.constant 0 : i32
    %179 = tpu.memref_slice %arg2[%178, %c0_i32_130] : memref<256x128xf32, #tpu.memory_space<any>> -> memref<1x128xf32, #tpu.memory_space<any>>
    %c3_i32_131 = arith.constant 3 : i32
    %c0_i32_132 = arith.constant 0 : i32
    %180 = tpu.memref_slice %arg6[%c2_i32_128, %c3_i32_131, %c0_i32_132] : memref<4x8x128xf32, #tpu.memory_space<vmem>> -> memref<1x1x128xf32, #tpu.memory_space<vmem>>
    %181 = tpu.memref_squeeze %180 : memref<1x1x128xf32, #tpu.memory_space<vmem>> -> memref<1x128xf32, #tpu.memory_space<vmem>>
    %182 = tpu.memref_slice %arg7[%c2_i32_129] : memref<4x!tpu.dma_semaphore, #tpu.memory_space<semaphore_mem>> -> memref<1x!tpu.dma_semaphore, #tpu.memory_space<semaphore_mem>>
    %183 = tpu.memref_squeeze %182 : memref<1x!tpu.dma_semaphore, #tpu.memory_space<semaphore_mem>> -> memref<!tpu.dma_semaphore, #tpu.memory_space<semaphore_mem>>
    tpu.enqueue_dma source(%179 : memref<1x128xf32, #tpu.memory_space<any>>) target(%181 : memref<1x128xf32, #tpu.memory_space<vmem>>) target_semaphore(%183 : memref<!tpu.dma_semaphore, #tpu.memory_space<semaphore_mem>>)
    %c16_i32_133 = arith.constant 16 : i32
    %184 = arith.addi %1, %c16_i32_133 : i32
    %c4_i32_134 = arith.constant 4 : i32
    %185 = arith.addi %184, %c4_i32_134 : i32
    %186 = arith.index_cast %185 : i32 to index
    %187 = memref.load %arg1[%186] : memref<64xi32, #tpu.memory_space<smem>>
    %c2_i32_135 = arith.constant 2 : i32
    %c2_i32_136 = arith.constant 2 : i32
    %c0_i32_137 = arith.constant 0 : i32
    %188 = tpu.memref_slice %arg2[%187, %c0_i32_137] : memref<256x128xf32, #tpu.memory_space<any>> -> memref<1x128xf32, #tpu.memory_space<any>>
    %c4_i32_138 = arith.constant 4 : i32
    %c0_i32_139 = arith.constant 0 : i32
    %189 = tpu.memref_slice %arg6[%c2_i32_135, %c4_i32_138, %c0_i32_139] : memref<4x8x128xf32, #tpu.memory_space<vmem>> -> memref<1x1x128xf32, #tpu.memory_space<vmem>>
    %190 = tpu.memref_squeeze %189 : memref<1x1x128xf32, #tpu.memory_space<vmem>> -> memref<1x128xf32, #tpu.memory_space<vmem>>
    %191 = tpu.memref_slice %arg7[%c2_i32_136] : memref<4x!tpu.dma_semaphore, #tpu.memory_space<semaphore_mem>> -> memref<1x!tpu.dma_semaphore, #tpu.memory_space<semaphore_mem>>
    %192 = tpu.memref_squeeze %191 : memref<1x!tpu.dma_semaphore, #tpu.memory_space<semaphore_mem>> -> memref<!tpu.dma_semaphore, #tpu.memory_space<semaphore_mem>>
    tpu.enqueue_dma source(%188 : memref<1x128xf32, #tpu.memory_space<any>>) target(%190 : memref<1x128xf32, #tpu.memory_space<vmem>>) target_semaphore(%192 : memref<!tpu.dma_semaphore, #tpu.memory_space<semaphore_mem>>)
    %c16_i32_140 = arith.constant 16 : i32
    %193 = arith.addi %1, %c16_i32_140 : i32
    %c5_i32_141 = arith.constant 5 : i32
    %194 = arith.addi %193, %c5_i32_141 : i32
    %195 = arith.index_cast %194 : i32 to index
    %196 = memref.load %arg1[%195] : memref<64xi32, #tpu.memory_space<smem>>
    %c2_i32_142 = arith.constant 2 : i32
    %c2_i32_143 = arith.constant 2 : i32
    %c0_i32_144 = arith.constant 0 : i32
    %197 = tpu.memref_slice %arg2[%196, %c0_i32_144] : memref<256x128xf32, #tpu.memory_space<any>> -> memref<1x128xf32, #tpu.memory_space<any>>
    %c5_i32_145 = arith.constant 5 : i32
    %c0_i32_146 = arith.constant 0 : i32
    %198 = tpu.memref_slice %arg6[%c2_i32_142, %c5_i32_145, %c0_i32_146] : memref<4x8x128xf32, #tpu.memory_space<vmem>> -> memref<1x1x128xf32, #tpu.memory_space<vmem>>
    %199 = tpu.memref_squeeze %198 : memref<1x1x128xf32, #tpu.memory_space<vmem>> -> memref<1x128xf32, #tpu.memory_space<vmem>>
    %200 = tpu.memref_slice %arg7[%c2_i32_143] : memref<4x!tpu.dma_semaphore, #tpu.memory_space<semaphore_mem>> -> memref<1x!tpu.dma_semaphore, #tpu.memory_space<semaphore_mem>>
    %201 = tpu.memref_squeeze %200 : memref<1x!tpu.dma_semaphore, #tpu.memory_space<semaphore_mem>> -> memref<!tpu.dma_semaphore, #tpu.memory_space<semaphore_mem>>
    tpu.enqueue_dma source(%197 : memref<1x128xf32, #tpu.memory_space<any>>) target(%199 : memref<1x128xf32, #tpu.memory_space<vmem>>) target_semaphore(%201 : memref<!tpu.dma_semaphore, #tpu.memory_space<semaphore_mem>>)
    %c16_i32_147 = arith.constant 16 : i32
    %202 = arith.addi %1, %c16_i32_147 : i32
    %c6_i32_148 = arith.constant 6 : i32
    %203 = arith.addi %202, %c6_i32_148 : i32
    %204 = arith.index_cast %203 : i32 to index
    %205 = memref.load %arg1[%204] : memref<64xi32, #tpu.memory_space<smem>>
    %c2_i32_149 = arith.constant 2 : i32
    %c2_i32_150 = arith.constant 2 : i32
    %c0_i32_151 = arith.constant 0 : i32
    %206 = tpu.memref_slice %arg2[%205, %c0_i32_151] : memref<256x128xf32, #tpu.memory_space<any>> -> memref<1x128xf32, #tpu.memory_space<any>>
    %c6_i32_152 = arith.constant 6 : i32
    %c0_i32_153 = arith.constant 0 : i32
    %207 = tpu.memref_slice %arg6[%c2_i32_149, %c6_i32_152, %c0_i32_153] : memref<4x8x128xf32, #tpu.memory_space<vmem>> -> memref<1x1x128xf32, #tpu.memory_space<vmem>>
    %208 = tpu.memref_squeeze %207 : memref<1x1x128xf32, #tpu.memory_space<vmem>> -> memref<1x128xf32, #tpu.memory_space<vmem>>
    %209 = tpu.memref_slice %arg7[%c2_i32_150] : memref<4x!tpu.dma_semaphore, #tpu.memory_space<semaphore_mem>> -> memref<1x!tpu.dma_semaphore, #tpu.memory_space<semaphore_mem>>
    %210 = tpu.memref_squeeze %209 : memref<1x!tpu.dma_semaphore, #tpu.memory_space<semaphore_mem>> -> memref<!tpu.dma_semaphore, #tpu.memory_space<semaphore_mem>>
    tpu.enqueue_dma source(%206 : memref<1x128xf32, #tpu.memory_space<any>>) target(%208 : memref<1x128xf32, #tpu.memory_space<vmem>>) target_semaphore(%210 : memref<!tpu.dma_semaphore, #tpu.memory_space<semaphore_mem>>)
    %c16_i32_154 = arith.constant 16 : i32
    %211 = arith.addi %1, %c16_i32_154 : i32
    %c7_i32_155 = arith.constant 7 : i32
    %212 = arith.addi %211, %c7_i32_155 : i32
    %213 = arith.index_cast %212 : i32 to index
    %214 = memref.load %arg1[%213] : memref<64xi32, #tpu.memory_space<smem>>
    %c2_i32_156 = arith.constant 2 : i32
    %c2_i32_157 = arith.constant 2 : i32
    %c0_i32_158 = arith.constant 0 : i32
    %215 = tpu.memref_slice %arg2[%214, %c0_i32_158] : memref<256x128xf32, #tpu.memory_space<any>> -> memref<1x128xf32, #tpu.memory_space<any>>
    %c7_i32_159 = arith.constant 7 : i32
    %c0_i32_160 = arith.constant 0 : i32
    %216 = tpu.memref_slice %arg6[%c2_i32_156, %c7_i32_159, %c0_i32_160] : memref<4x8x128xf32, #tpu.memory_space<vmem>> -> memref<1x1x128xf32, #tpu.memory_space<vmem>>
    %217 = tpu.memref_squeeze %216 : memref<1x1x128xf32, #tpu.memory_space<vmem>> -> memref<1x128xf32, #tpu.memory_space<vmem>>
    %218 = tpu.memref_slice %arg7[%c2_i32_157] : memref<4x!tpu.dma_semaphore, #tpu.memory_space<semaphore_mem>> -> memref<1x!tpu.dma_semaphore, #tpu.memory_space<semaphore_mem>>
    %219 = tpu.memref_squeeze %218 : memref<1x!tpu.dma_semaphore, #tpu.memory_space<semaphore_mem>> -> memref<!tpu.dma_semaphore, #tpu.memory_space<semaphore_mem>>
    tpu.enqueue_dma source(%215 : memref<1x128xf32, #tpu.memory_space<any>>) target(%217 : memref<1x128xf32, #tpu.memory_space<vmem>>) target_semaphore(%219 : memref<!tpu.dma_semaphore, #tpu.memory_space<semaphore_mem>>)
    %c24_i32 = arith.constant 24 : i32
    %220 = arith.addi %1, %c24_i32 : i32
    %c0_i32_161 = arith.constant 0 : i32
    %221 = arith.addi %220, %c0_i32_161 : i32
    %222 = arith.index_cast %221 : i32 to index
    %223 = memref.load %arg1[%222] : memref<64xi32, #tpu.memory_space<smem>>
    %c3_i32_162 = arith.constant 3 : i32
    %c3_i32_163 = arith.constant 3 : i32
    %c0_i32_164 = arith.constant 0 : i32
    %224 = tpu.memref_slice %arg2[%223, %c0_i32_164] : memref<256x128xf32, #tpu.memory_space<any>> -> memref<1x128xf32, #tpu.memory_space<any>>
    %c0_i32_165 = arith.constant 0 : i32
    %c0_i32_166 = arith.constant 0 : i32
    %225 = tpu.memref_slice %arg6[%c3_i32_162, %c0_i32_165, %c0_i32_166] : memref<4x8x128xf32, #tpu.memory_space<vmem>> -> memref<1x1x128xf32, #tpu.memory_space<vmem>>
    %226 = tpu.memref_squeeze %225 : memref<1x1x128xf32, #tpu.memory_space<vmem>> -> memref<1x128xf32, #tpu.memory_space<vmem>>
    %227 = tpu.memref_slice %arg7[%c3_i32_163] : memref<4x!tpu.dma_semaphore, #tpu.memory_space<semaphore_mem>> -> memref<1x!tpu.dma_semaphore, #tpu.memory_space<semaphore_mem>>
    %228 = tpu.memref_squeeze %227 : memref<1x!tpu.dma_semaphore, #tpu.memory_space<semaphore_mem>> -> memref<!tpu.dma_semaphore, #tpu.memory_space<semaphore_mem>>
    tpu.enqueue_dma source(%224 : memref<1x128xf32, #tpu.memory_space<any>>) target(%226 : memref<1x128xf32, #tpu.memory_space<vmem>>) target_semaphore(%228 : memref<!tpu.dma_semaphore, #tpu.memory_space<semaphore_mem>>)
    %c24_i32_167 = arith.constant 24 : i32
    %229 = arith.addi %1, %c24_i32_167 : i32
    %c1_i32_168 = arith.constant 1 : i32
    %230 = arith.addi %229, %c1_i32_168 : i32
    %231 = arith.index_cast %230 : i32 to index
    %232 = memref.load %arg1[%231] : memref<64xi32, #tpu.memory_space<smem>>
    %c3_i32_169 = arith.constant 3 : i32
    %c3_i32_170 = arith.constant 3 : i32
    %c0_i32_171 = arith.constant 0 : i32
    %233 = tpu.memref_slice %arg2[%232, %c0_i32_171] : memref<256x128xf32, #tpu.memory_space<any>> -> memref<1x128xf32, #tpu.memory_space<any>>
    %c1_i32_172 = arith.constant 1 : i32
    %c0_i32_173 = arith.constant 0 : i32
    %234 = tpu.memref_slice %arg6[%c3_i32_169, %c1_i32_172, %c0_i32_173] : memref<4x8x128xf32, #tpu.memory_space<vmem>> -> memref<1x1x128xf32, #tpu.memory_space<vmem>>
    %235 = tpu.memref_squeeze %234 : memref<1x1x128xf32, #tpu.memory_space<vmem>> -> memref<1x128xf32, #tpu.memory_space<vmem>>
    %236 = tpu.memref_slice %arg7[%c3_i32_170] : memref<4x!tpu.dma_semaphore, #tpu.memory_space<semaphore_mem>> -> memref<1x!tpu.dma_semaphore, #tpu.memory_space<semaphore_mem>>
    %237 = tpu.memref_squeeze %236 : memref<1x!tpu.dma_semaphore, #tpu.memory_space<semaphore_mem>> -> memref<!tpu.dma_semaphore, #tpu.memory_space<semaphore_mem>>
    tpu.enqueue_dma source(%233 : memref<1x128xf32, #tpu.memory_space<any>>) target(%235 : memref<1x128xf32, #tpu.memory_space<vmem>>) target_semaphore(%237 : memref<!tpu.dma_semaphore, #tpu.memory_space<semaphore_mem>>)
    %c24_i32_174 = arith.constant 24 : i32
    %238 = arith.addi %1, %c24_i32_174 : i32
    %c2_i32_175 = arith.constant 2 : i32
    %239 = arith.addi %238, %c2_i32_175 : i32
    %240 = arith.index_cast %239 : i32 to index
    %241 = memref.load %arg1[%240] : memref<64xi32, #tpu.memory_space<smem>>
    %c3_i32_176 = arith.constant 3 : i32
    %c3_i32_177 = arith.constant 3 : i32
    %c0_i32_178 = arith.constant 0 : i32
    %242 = tpu.memref_slice %arg2[%241, %c0_i32_178] : memref<256x128xf32, #tpu.memory_space<any>> -> memref<1x128xf32, #tpu.memory_space<any>>
    %c2_i32_179 = arith.constant 2 : i32
    %c0_i32_180 = arith.constant 0 : i32
    %243 = tpu.memref_slice %arg6[%c3_i32_176, %c2_i32_179, %c0_i32_180] : memref<4x8x128xf32, #tpu.memory_space<vmem>> -> memref<1x1x128xf32, #tpu.memory_space<vmem>>
    %244 = tpu.memref_squeeze %243 : memref<1x1x128xf32, #tpu.memory_space<vmem>> -> memref<1x128xf32, #tpu.memory_space<vmem>>
    %245 = tpu.memref_slice %arg7[%c3_i32_177] : memref<4x!tpu.dma_semaphore, #tpu.memory_space<semaphore_mem>> -> memref<1x!tpu.dma_semaphore, #tpu.memory_space<semaphore_mem>>
    %246 = tpu.memref_squeeze %245 : memref<1x!tpu.dma_semaphore, #tpu.memory_space<semaphore_mem>> -> memref<!tpu.dma_semaphore, #tpu.memory_space<semaphore_mem>>
    tpu.enqueue_dma source(%242 : memref<1x128xf32, #tpu.memory_space<any>>) target(%244 : memref<1x128xf32, #tpu.memory_space<vmem>>) target_semaphore(%246 : memref<!tpu.dma_semaphore, #tpu.memory_space<semaphore_mem>>)
    %c24_i32_181 = arith.constant 24 : i32
    %247 = arith.addi %1, %c24_i32_181 : i32
    %c3_i32_182 = arith.constant 3 : i32
    %248 = arith.addi %247, %c3_i32_182 : i32
    %249 = arith.index_cast %248 : i32 to index
    %250 = memref.load %arg1[%249] : memref<64xi32, #tpu.memory_space<smem>>
    %c3_i32_183 = arith.constant 3 : i32
    %c3_i32_184 = arith.constant 3 : i32
    %c0_i32_185 = arith.constant 0 : i32
    %251 = tpu.memref_slice %arg2[%250, %c0_i32_185] : memref<256x128xf32, #tpu.memory_space<any>> -> memref<1x128xf32, #tpu.memory_space<any>>
    %c3_i32_186 = arith.constant 3 : i32
    %c0_i32_187 = arith.constant 0 : i32
    %252 = tpu.memref_slice %arg6[%c3_i32_183, %c3_i32_186, %c0_i32_187] : memref<4x8x128xf32, #tpu.memory_space<vmem>> -> memref<1x1x128xf32, #tpu.memory_space<vmem>>
    %253 = tpu.memref_squeeze %252 : memref<1x1x128xf32, #tpu.memory_space<vmem>> -> memref<1x128xf32, #tpu.memory_space<vmem>>
    %254 = tpu.memref_slice %arg7[%c3_i32_184] : memref<4x!tpu.dma_semaphore, #tpu.memory_space<semaphore_mem>> -> memref<1x!tpu.dma_semaphore, #tpu.memory_space<semaphore_mem>>
    %255 = tpu.memref_squeeze %254 : memref<1x!tpu.dma_semaphore, #tpu.memory_space<semaphore_mem>> -> memref<!tpu.dma_semaphore, #tpu.memory_space<semaphore_mem>>
    tpu.enqueue_dma source(%251 : memref<1x128xf32, #tpu.memory_space<any>>) target(%253 : memref<1x128xf32, #tpu.memory_space<vmem>>) target_semaphore(%255 : memref<!tpu.dma_semaphore, #tpu.memory_space<semaphore_mem>>)
    %c24_i32_188 = arith.constant 24 : i32
    %256 = arith.addi %1, %c24_i32_188 : i32
    %c4_i32_189 = arith.constant 4 : i32
    %257 = arith.addi %256, %c4_i32_189 : i32
    %258 = arith.index_cast %257 : i32 to index
    %259 = memref.load %arg1[%258] : memref<64xi32, #tpu.memory_space<smem>>
    %c3_i32_190 = arith.constant 3 : i32
    %c3_i32_191 = arith.constant 3 : i32
    %c0_i32_192 = arith.constant 0 : i32
    %260 = tpu.memref_slice %arg2[%259, %c0_i32_192] : memref<256x128xf32, #tpu.memory_space<any>> -> memref<1x128xf32, #tpu.memory_space<any>>
    %c4_i32_193 = arith.constant 4 : i32
    %c0_i32_194 = arith.constant 0 : i32
    %261 = tpu.memref_slice %arg6[%c3_i32_190, %c4_i32_193, %c0_i32_194] : memref<4x8x128xf32, #tpu.memory_space<vmem>> -> memref<1x1x128xf32, #tpu.memory_space<vmem>>
    %262 = tpu.memref_squeeze %261 : memref<1x1x128xf32, #tpu.memory_space<vmem>> -> memref<1x128xf32, #tpu.memory_space<vmem>>
    %263 = tpu.memref_slice %arg7[%c3_i32_191] : memref<4x!tpu.dma_semaphore, #tpu.memory_space<semaphore_mem>> -> memref<1x!tpu.dma_semaphore, #tpu.memory_space<semaphore_mem>>
    %264 = tpu.memref_squeeze %263 : memref<1x!tpu.dma_semaphore, #tpu.memory_space<semaphore_mem>> -> memref<!tpu.dma_semaphore, #tpu.memory_space<semaphore_mem>>
    tpu.enqueue_dma source(%260 : memref<1x128xf32, #tpu.memory_space<any>>) target(%262 : memref<1x128xf32, #tpu.memory_space<vmem>>) target_semaphore(%264 : memref<!tpu.dma_semaphore, #tpu.memory_space<semaphore_mem>>)
    %c24_i32_195 = arith.constant 24 : i32
    %265 = arith.addi %1, %c24_i32_195 : i32
    %c5_i32_196 = arith.constant 5 : i32
    %266 = arith.addi %265, %c5_i32_196 : i32
    %267 = arith.index_cast %266 : i32 to index
    %268 = memref.load %arg1[%267] : memref<64xi32, #tpu.memory_space<smem>>
    %c3_i32_197 = arith.constant 3 : i32
    %c3_i32_198 = arith.constant 3 : i32
    %c0_i32_199 = arith.constant 0 : i32
    %269 = tpu.memref_slice %arg2[%268, %c0_i32_199] : memref<256x128xf32, #tpu.memory_space<any>> -> memref<1x128xf32, #tpu.memory_space<any>>
    %c5_i32_200 = arith.constant 5 : i32
    %c0_i32_201 = arith.constant 0 : i32
    %270 = tpu.memref_slice %arg6[%c3_i32_197, %c5_i32_200, %c0_i32_201] : memref<4x8x128xf32, #tpu.memory_space<vmem>> -> memref<1x1x128xf32, #tpu.memory_space<vmem>>
    %271 = tpu.memref_squeeze %270 : memref<1x1x128xf32, #tpu.memory_space<vmem>> -> memref<1x128xf32, #tpu.memory_space<vmem>>
    %272 = tpu.memref_slice %arg7[%c3_i32_198] : memref<4x!tpu.dma_semaphore, #tpu.memory_space<semaphore_mem>> -> memref<1x!tpu.dma_semaphore, #tpu.memory_space<semaphore_mem>>
    %273 = tpu.memref_squeeze %272 : memref<1x!tpu.dma_semaphore, #tpu.memory_space<semaphore_mem>> -> memref<!tpu.dma_semaphore, #tpu.memory_space<semaphore_mem>>
    tpu.enqueue_dma source(%269 : memref<1x128xf32, #tpu.memory_space<any>>) target(%271 : memref<1x128xf32, #tpu.memory_space<vmem>>) target_semaphore(%273 : memref<!tpu.dma_semaphore, #tpu.memory_space<semaphore_mem>>)
    %c24_i32_202 = arith.constant 24 : i32
    %274 = arith.addi %1, %c24_i32_202 : i32
    %c6_i32_203 = arith.constant 6 : i32
    %275 = arith.addi %274, %c6_i32_203 : i32
    %276 = arith.index_cast %275 : i32 to index
    %277 = memref.load %arg1[%276] : memref<64xi32, #tpu.memory_space<smem>>
    %c3_i32_204 = arith.constant 3 : i32
    %c3_i32_205 = arith.constant 3 : i32
    %c0_i32_206 = arith.constant 0 : i32
    %278 = tpu.memref_slice %arg2[%277, %c0_i32_206] : memref<256x128xf32, #tpu.memory_space<any>> -> memref<1x128xf32, #tpu.memory_space<any>>
    %c6_i32_207 = arith.constant 6 : i32
    %c0_i32_208 = arith.constant 0 : i32
    %279 = tpu.memref_slice %arg6[%c3_i32_204, %c6_i32_207, %c0_i32_208] : memref<4x8x128xf32, #tpu.memory_space<vmem>> -> memref<1x1x128xf32, #tpu.memory_space<vmem>>
    %280 = tpu.memref_squeeze %279 : memref<1x1x128xf32, #tpu.memory_space<vmem>> -> memref<1x128xf32, #tpu.memory_space<vmem>>
    %281 = tpu.memref_slice %arg7[%c3_i32_205] : memref<4x!tpu.dma_semaphore, #tpu.memory_space<semaphore_mem>> -> memref<1x!tpu.dma_semaphore, #tpu.memory_space<semaphore_mem>>
    %282 = tpu.memref_squeeze %281 : memref<1x!tpu.dma_semaphore, #tpu.memory_space<semaphore_mem>> -> memref<!tpu.dma_semaphore, #tpu.memory_space<semaphore_mem>>
    tpu.enqueue_dma source(%278 : memref<1x128xf32, #tpu.memory_space<any>>) target(%280 : memref<1x128xf32, #tpu.memory_space<vmem>>) target_semaphore(%282 : memref<!tpu.dma_semaphore, #tpu.memory_space<semaphore_mem>>)
    %c24_i32_209 = arith.constant 24 : i32
    %283 = arith.addi %1, %c24_i32_209 : i32
    %c7_i32_210 = arith.constant 7 : i32
    %284 = arith.addi %283, %c7_i32_210 : i32
    %285 = arith.index_cast %284 : i32 to index
    %286 = memref.load %arg1[%285] : memref<64xi32, #tpu.memory_space<smem>>
    %c3_i32_211 = arith.constant 3 : i32
    %c3_i32_212 = arith.constant 3 : i32
    %c0_i32_213 = arith.constant 0 : i32
    %287 = tpu.memref_slice %arg2[%286, %c0_i32_213] : memref<256x128xf32, #tpu.memory_space<any>> -> memref<1x128xf32, #tpu.memory_space<any>>
    %c7_i32_214 = arith.constant 7 : i32
    %c0_i32_215 = arith.constant 0 : i32
    %288 = tpu.memref_slice %arg6[%c3_i32_211, %c7_i32_214, %c0_i32_215] : memref<4x8x128xf32, #tpu.memory_space<vmem>> -> memref<1x1x128xf32, #tpu.memory_space<vmem>>
    %289 = tpu.memref_squeeze %288 : memref<1x1x128xf32, #tpu.memory_space<vmem>> -> memref<1x128xf32, #tpu.memory_space<vmem>>
    %290 = tpu.memref_slice %arg7[%c3_i32_212] : memref<4x!tpu.dma_semaphore, #tpu.memory_space<semaphore_mem>> -> memref<1x!tpu.dma_semaphore, #tpu.memory_space<semaphore_mem>>
    %291 = tpu.memref_squeeze %290 : memref<1x!tpu.dma_semaphore, #tpu.memory_space<semaphore_mem>> -> memref<!tpu.dma_semaphore, #tpu.memory_space<semaphore_mem>>
    tpu.enqueue_dma source(%287 : memref<1x128xf32, #tpu.memory_space<any>>) target(%289 : memref<1x128xf32, #tpu.memory_space<vmem>>) target_semaphore(%291 : memref<!tpu.dma_semaphore, #tpu.memory_space<semaphore_mem>>)
    %c0_i32_216 = arith.constant 0 : i32
    %c0_i32_217 = arith.constant 0 : i32
    %c0_i32_218 = arith.constant 0 : i32
    %c0_i32_219 = arith.constant 0 : i32
    %292 = tpu.memref_slice %arg2[%c0_i32_218, %c0_i32_219] : memref<256x128xf32, #tpu.memory_space<any>> -> memref<8x128xf32, #tpu.memory_space<any>>
    %c0_i32_220 = arith.constant 0 : i32
    %c0_i32_221 = arith.constant 0 : i32
    %293 = tpu.memref_slice %arg6[%c0_i32_216, %c0_i32_220, %c0_i32_221] : memref<4x8x128xf32, #tpu.memory_space<vmem>> -> memref<1x8x128xf32, #tpu.memory_space<vmem>>
    %294 = tpu.memref_squeeze %293 : memref<1x8x128xf32, #tpu.memory_space<vmem>> -> memref<8x128xf32, #tpu.memory_space<vmem>>
    %295 = tpu.memref_slice %arg7[%c0_i32_217] : memref<4x!tpu.dma_semaphore, #tpu.memory_space<semaphore_mem>> -> memref<1x!tpu.dma_semaphore, #tpu.memory_space<semaphore_mem>>
    %296 = tpu.memref_squeeze %295 : memref<1x!tpu.dma_semaphore, #tpu.memory_space<semaphore_mem>> -> memref<!tpu.dma_semaphore, #tpu.memory_space<semaphore_mem>>
    tpu.wait_dma2 semaphore(%296 : memref<!tpu.dma_semaphore, #tpu.memory_space<semaphore_mem>>) src(%292 : memref<8x128xf32, #tpu.memory_space<any>>) dst(%294 : memref<8x128xf32, #tpu.memory_space<vmem>>)
    %c0_222 = arith.constant 0 : index
    %c0_223 = arith.constant 0 : index
    %c0_224 = arith.constant 0 : index
    %297 = vector.load %arg6[%c0_222, %c0_223, %c0_224] : memref<4x8x128xf32, #tpu.memory_space<vmem>>, vector<1x8x128xf32>
    %298 = vector.shape_cast %297 : vector<1x8x128xf32> to vector<8x128xf32>
    %cst = arith.constant dense<0.000000e+00> : vector<8xf32>
    %299 = vector.multi_reduction <add>, %298, %cst [1] : vector<8x128xf32> to vector<8xf32>
    %300 = vector.shape_cast %299 : vector<8xf32> to vector<8x1xf32>
    %301 = arith.mulf %298, %298 : vector<8x128xf32>
    %cst_225 = arith.constant dense<0.000000e+00> : vector<8xf32>
    %302 = vector.multi_reduction <add>, %301, %cst_225 [1] : vector<8x128xf32> to vector<8xf32>
    %303 = vector.shape_cast %302 : vector<8xf32> to vector<8x1xf32>
    %cst_226 = arith.constant 7.812500e-03 : f32
    %304 = vector.broadcast %cst_226 : f32 to vector<8x1xf32>
    %305 = arith.mulf %300, %304 : vector<8x1xf32>
    %cst_227 = arith.constant 7.812500e-03 : f32
    %306 = vector.broadcast %cst_227 : f32 to vector<8x1xf32>
    %307 = arith.mulf %303, %306 : vector<8x1xf32>
    %308 = arith.mulf %305, %305 : vector<8x1xf32>
    %309 = arith.subf %307, %308 : vector<8x1xf32>
    %cst_228 = arith.constant 0.000000e+00 : f32
    %310 = vector.broadcast %cst_228 : f32 to vector<8x1xf32>
    %311 = arith.maximumf %309, %310 : vector<8x1xf32>
    %cst_229 = arith.constant 9.99999996E-13 : f32
    %312 = vector.broadcast %cst_229 : f32 to vector<8x1xf32>
    %313 = arith.addf %311, %312 : vector<8x1xf32>
    %314 = math.rsqrt %313 : vector<8x1xf32>
    %315 = vector.broadcast %305 : vector<8x1xf32> to vector<8x128xf32>
    %316 = arith.subf %298, %315 : vector<8x128xf32>
    %317 = vector.broadcast %314 : vector<8x1xf32> to vector<8x128xf32>
    %318 = arith.mulf %316, %317 : vector<8x128xf32>
    %319 = vector.broadcast %2 : vector<1x128xf32> to vector<8x128xf32>
    %320 = arith.mulf %318, %319 : vector<8x128xf32>
    %321 = vector.broadcast %3 : vector<1x128xf32> to vector<8x128xf32>
    %322 = arith.addf %320, %321 : vector<8x128xf32>
    %c0_230 = arith.constant 0 : index
    %c0_231 = arith.constant 0 : index
    %323 = vector.load %arg5[%c0_230, %c0_231] : memref<32x128xf32, #tpu.memory_space<vmem>>, vector<8x128xf32>
    tpu.vector_store %arg5[%c0_230, %c0_231], %322 {strides = array<i32>} : memref<32x128xf32, #tpu.memory_space<vmem>>, vector<8x128xf32>,
    %c1_i32_232 = arith.constant 1 : i32
    %c1_i32_233 = arith.constant 1 : i32
    %c0_i32_234 = arith.constant 0 : i32
    %c0_i32_235 = arith.constant 0 : i32
    %324 = tpu.memref_slice %arg2[%c0_i32_234, %c0_i32_235] : memref<256x128xf32, #tpu.memory_space<any>> -> memref<8x128xf32, #tpu.memory_space<any>>
    %c0_i32_236 = arith.constant 0 : i32
    %c0_i32_237 = arith.constant 0 : i32
    %325 = tpu.memref_slice %arg6[%c1_i32_232, %c0_i32_236, %c0_i32_237] : memref<4x8x128xf32, #tpu.memory_space<vmem>> -> memref<1x8x128xf32, #tpu.memory_space<vmem>>
    %326 = tpu.memref_squeeze %325 : memref<1x8x128xf32, #tpu.memory_space<vmem>> -> memref<8x128xf32, #tpu.memory_space<vmem>>
    %327 = tpu.memref_slice %arg7[%c1_i32_233] : memref<4x!tpu.dma_semaphore, #tpu.memory_space<semaphore_mem>> -> memref<1x!tpu.dma_semaphore, #tpu.memory_space<semaphore_mem>>
    %328 = tpu.memref_squeeze %327 : memref<1x!tpu.dma_semaphore, #tpu.memory_space<semaphore_mem>> -> memref<!tpu.dma_semaphore, #tpu.memory_space<semaphore_mem>>
    tpu.wait_dma2 semaphore(%328 : memref<!tpu.dma_semaphore, #tpu.memory_space<semaphore_mem>>) src(%324 : memref<8x128xf32, #tpu.memory_space<any>>) dst(%326 : memref<8x128xf32, #tpu.memory_space<vmem>>)
    %c1 = arith.constant 1 : index
    %c0_238 = arith.constant 0 : index
    %c0_239 = arith.constant 0 : index
    %329 = vector.load %arg6[%c1, %c0_238, %c0_239] : memref<4x8x128xf32, #tpu.memory_space<vmem>>, vector<1x8x128xf32>
    %330 = vector.shape_cast %329 : vector<1x8x128xf32> to vector<8x128xf32>
    %cst_240 = arith.constant dense<0.000000e+00> : vector<8xf32>
    %331 = vector.multi_reduction <add>, %330, %cst_240 [1] : vector<8x128xf32> to vector<8xf32>
    %332 = vector.shape_cast %331 : vector<8xf32> to vector<8x1xf32>
    %333 = arith.mulf %330, %330 : vector<8x128xf32>
    %cst_241 = arith.constant dense<0.000000e+00> : vector<8xf32>
    %334 = vector.multi_reduction <add>, %333, %cst_241 [1] : vector<8x128xf32> to vector<8xf32>
    %335 = vector.shape_cast %334 : vector<8xf32> to vector<8x1xf32>
    %cst_242 = arith.constant 7.812500e-03 : f32
    %336 = vector.broadcast %cst_242 : f32 to vector<8x1xf32>
    %337 = arith.mulf %332, %336 : vector<8x1xf32>
    %cst_243 = arith.constant 7.812500e-03 : f32
    %338 = vector.broadcast %cst_243 : f32 to vector<8x1xf32>
    %339 = arith.mulf %335, %338 : vector<8x1xf32>
    %340 = arith.mulf %337, %337 : vector<8x1xf32>
    %341 = arith.subf %339, %340 : vector<8x1xf32>
    %cst_244 = arith.constant 0.000000e+00 : f32
    %342 = vector.broadcast %cst_244 : f32 to vector<8x1xf32>
    %343 = arith.maximumf %341, %342 : vector<8x1xf32>
    %cst_245 = arith.constant 9.99999996E-13 : f32
    %344 = vector.broadcast %cst_245 : f32 to vector<8x1xf32>
    %345 = arith.addf %343, %344 : vector<8x1xf32>
    %346 = math.rsqrt %345 : vector<8x1xf32>
    %347 = vector.broadcast %337 : vector<8x1xf32> to vector<8x128xf32>
    %348 = arith.subf %330, %347 : vector<8x128xf32>
    %349 = vector.broadcast %346 : vector<8x1xf32> to vector<8x128xf32>
    %350 = arith.mulf %348, %349 : vector<8x128xf32>
    %351 = vector.broadcast %2 : vector<1x128xf32> to vector<8x128xf32>
    %352 = arith.mulf %350, %351 : vector<8x128xf32>
    %353 = vector.broadcast %3 : vector<1x128xf32> to vector<8x128xf32>
    %354 = arith.addf %352, %353 : vector<8x128xf32>
    %c8 = arith.constant 8 : index
    %c0_246 = arith.constant 0 : index
    %355 = vector.load %arg5[%c8, %c0_246] : memref<32x128xf32, #tpu.memory_space<vmem>>, vector<8x128xf32>
    tpu.vector_store %arg5[%c8, %c0_246], %354 {strides = array<i32>} : memref<32x128xf32, #tpu.memory_space<vmem>>, vector<8x128xf32>,
    %c2_i32_247 = arith.constant 2 : i32
    %c2_i32_248 = arith.constant 2 : i32
    %c0_i32_249 = arith.constant 0 : i32
    %c0_i32_250 = arith.constant 0 : i32
    %356 = tpu.memref_slice %arg2[%c0_i32_249, %c0_i32_250] : memref<256x128xf32, #tpu.memory_space<any>> -> memref<8x128xf32, #tpu.memory_space<any>>
    %c0_i32_251 = arith.constant 0 : i32
    %c0_i32_252 = arith.constant 0 : i32
    %357 = tpu.memref_slice %arg6[%c2_i32_247, %c0_i32_251, %c0_i32_252] : memref<4x8x128xf32, #tpu.memory_space<vmem>> -> memref<1x8x128xf32, #tpu.memory_space<vmem>>
    %358 = tpu.memref_squeeze %357 : memref<1x8x128xf32, #tpu.memory_space<vmem>> -> memref<8x128xf32, #tpu.memory_space<vmem>>
    %359 = tpu.memref_slice %arg7[%c2_i32_248] : memref<4x!tpu.dma_semaphore, #tpu.memory_space<semaphore_mem>> -> memref<1x!tpu.dma_semaphore, #tpu.memory_space<semaphore_mem>>
    %360 = tpu.memref_squeeze %359 : memref<1x!tpu.dma_semaphore, #tpu.memory_space<semaphore_mem>> -> memref<!tpu.dma_semaphore, #tpu.memory_space<semaphore_mem>>
    tpu.wait_dma2 semaphore(%360 : memref<!tpu.dma_semaphore, #tpu.memory_space<semaphore_mem>>) src(%356 : memref<8x128xf32, #tpu.memory_space<any>>) dst(%358 : memref<8x128xf32, #tpu.memory_space<vmem>>)
    %c2 = arith.constant 2 : index
    %c0_253 = arith.constant 0 : index
    %c0_254 = arith.constant 0 : index
    %361 = vector.load %arg6[%c2, %c0_253, %c0_254] : memref<4x8x128xf32, #tpu.memory_space<vmem>>, vector<1x8x128xf32>
    %362 = vector.shape_cast %361 : vector<1x8x128xf32> to vector<8x128xf32>
    %cst_255 = arith.constant dense<0.000000e+00> : vector<8xf32>
    %363 = vector.multi_reduction <add>, %362, %cst_255 [1] : vector<8x128xf32> to vector<8xf32>
    %364 = vector.shape_cast %363 : vector<8xf32> to vector<8x1xf32>
    %365 = arith.mulf %362, %362 : vector<8x128xf32>
    %cst_256 = arith.constant dense<0.000000e+00> : vector<8xf32>
    %366 = vector.multi_reduction <add>, %365, %cst_256 [1] : vector<8x128xf32> to vector<8xf32>
    %367 = vector.shape_cast %366 : vector<8xf32> to vector<8x1xf32>
    %cst_257 = arith.constant 7.812500e-03 : f32
    %368 = vector.broadcast %cst_257 : f32 to vector<8x1xf32>
    %369 = arith.mulf %364, %368 : vector<8x1xf32>
    %cst_258 = arith.constant 7.812500e-03 : f32
    %370 = vector.broadcast %cst_258 : f32 to vector<8x1xf32>
    %371 = arith.mulf %367, %370 : vector<8x1xf32>
    %372 = arith.mulf %369, %369 : vector<8x1xf32>
    %373 = arith.subf %371, %372 : vector<8x1xf32>
    %cst_259 = arith.constant 0.000000e+00 : f32
    %374 = vector.broadcast %cst_259 : f32 to vector<8x1xf32>
    %375 = arith.maximumf %373, %374 : vector<8x1xf32>
    %cst_260 = arith.constant 9.99999996E-13 : f32
    %376 = vector.broadcast %cst_260 : f32 to vector<8x1xf32>
    %377 = arith.addf %375, %376 : vector<8x1xf32>
    %378 = math.rsqrt %377 : vector<8x1xf32>
    %379 = vector.broadcast %369 : vector<8x1xf32> to vector<8x128xf32>
    %380 = arith.subf %362, %379 : vector<8x128xf32>
    %381 = vector.broadcast %378 : vector<8x1xf32> to vector<8x128xf32>
    %382 = arith.mulf %380, %381 : vector<8x128xf32>
    %383 = vector.broadcast %2 : vector<1x128xf32> to vector<8x128xf32>
    %384 = arith.mulf %382, %383 : vector<8x128xf32>
    %385 = vector.broadcast %3 : vector<1x128xf32> to vector<8x128xf32>
    %386 = arith.addf %384, %385 : vector<8x128xf32>
    %c16 = arith.constant 16 : index
    %c0_261 = arith.constant 0 : index
    %387 = vector.load %arg5[%c16, %c0_261] : memref<32x128xf32, #tpu.memory_space<vmem>>, vector<8x128xf32>
    tpu.vector_store %arg5[%c16, %c0_261], %386 {strides = array<i32>} : memref<32x128xf32, #tpu.memory_space<vmem>>, vector<8x128xf32>,
    %c3_i32_262 = arith.constant 3 : i32
    %c3_i32_263 = arith.constant 3 : i32
    %c0_i32_264 = arith.constant 0 : i32
    %c0_i32_265 = arith.constant 0 : i32
    %388 = tpu.memref_slice %arg2[%c0_i32_264, %c0_i32_265] : memref<256x128xf32, #tpu.memory_space<any>> -> memref<8x128xf32, #tpu.memory_space<any>>
    %c0_i32_266 = arith.constant 0 : i32
    %c0_i32_267 = arith.constant 0 : i32
    %389 = tpu.memref_slice %arg6[%c3_i32_262, %c0_i32_266, %c0_i32_267] : memref<4x8x128xf32, #tpu.memory_space<vmem>> -> memref<1x8x128xf32, #tpu.memory_space<vmem>>
    %390 = tpu.memref_squeeze %389 : memref<1x8x128xf32, #tpu.memory_space<vmem>> -> memref<8x128xf32, #tpu.memory_space<vmem>>
    %391 = tpu.memref_slice %arg7[%c3_i32_263] : memref<4x!tpu.dma_semaphore, #tpu.memory_space<semaphore_mem>> -> memref<1x!tpu.dma_semaphore, #tpu.memory_space<semaphore_mem>>
    %392 = tpu.memref_squeeze %391 : memref<1x!tpu.dma_semaphore, #tpu.memory_space<semaphore_mem>> -> memref<!tpu.dma_semaphore, #tpu.memory_space<semaphore_mem>>
    tpu.wait_dma2 semaphore(%392 : memref<!tpu.dma_semaphore, #tpu.memory_space<semaphore_mem>>) src(%388 : memref<8x128xf32, #tpu.memory_space<any>>) dst(%390 : memref<8x128xf32, #tpu.memory_space<vmem>>)
    %c3 = arith.constant 3 : index
    %c0_268 = arith.constant 0 : index
    %c0_269 = arith.constant 0 : index
    %393 = vector.load %arg6[%c3, %c0_268, %c0_269] : memref<4x8x128xf32, #tpu.memory_space<vmem>>, vector<1x8x128xf32>
    %394 = vector.shape_cast %393 : vector<1x8x128xf32> to vector<8x128xf32>
    %cst_270 = arith.constant dense<0.000000e+00> : vector<8xf32>
    %395 = vector.multi_reduction <add>, %394, %cst_270 [1] : vector<8x128xf32> to vector<8xf32>
    %396 = vector.shape_cast %395 : vector<8xf32> to vector<8x1xf32>
    %397 = arith.mulf %394, %394 : vector<8x128xf32>
    %cst_271 = arith.constant dense<0.000000e+00> : vector<8xf32>
    %398 = vector.multi_reduction <add>, %397, %cst_271 [1] : vector<8x128xf32> to vector<8xf32>
    %399 = vector.shape_cast %398 : vector<8xf32> to vector<8x1xf32>
    %cst_272 = arith.constant 7.812500e-03 : f32
    %400 = vector.broadcast %cst_272 : f32 to vector<8x1xf32>
    %401 = arith.mulf %396, %400 : vector<8x1xf32>
    %cst_273 = arith.constant 7.812500e-03 : f32
    %402 = vector.broadcast %cst_273 : f32 to vector<8x1xf32>
    %403 = arith.mulf %399, %402 : vector<8x1xf32>
    %404 = arith.mulf %401, %401 : vector<8x1xf32>
    %405 = arith.subf %403, %404 : vector<8x1xf32>
    %cst_274 = arith.constant 0.000000e+00 : f32
    %406 = vector.broadcast %cst_274 : f32 to vector<8x1xf32>
    %407 = arith.maximumf %405, %406 : vector<8x1xf32>
    %cst_275 = arith.constant 9.99999996E-13 : f32
    %408 = vector.broadcast %cst_275 : f32 to vector<8x1xf32>
    %409 = arith.addf %407, %408 : vector<8x1xf32>
    %410 = math.rsqrt %409 : vector<8x1xf32>
    %411 = vector.broadcast %401 : vector<8x1xf32> to vector<8x128xf32>
    %412 = arith.subf %394, %411 : vector<8x128xf32>
    %413 = vector.broadcast %410 : vector<8x1xf32> to vector<8x128xf32>
    %414 = arith.mulf %412, %413 : vector<8x128xf32>
    %415 = vector.broadcast %2 : vector<1x128xf32> to vector<8x128xf32>
    %416 = arith.mulf %414, %415 : vector<8x128xf32>
    %417 = vector.broadcast %3 : vector<1x128xf32> to vector<8x128xf32>
    %418 = arith.addf %416, %417 : vector<8x128xf32>
    %c24 = arith.constant 24 : index
    %c0_276 = arith.constant 0 : index
    %419 = vector.load %arg5[%c24, %c0_276] : memref<32x128xf32, #tpu.memory_space<vmem>>, vector<8x128xf32>
    tpu.vector_store %arg5[%c24, %c0_276], %418 {strides = array<i32>} : memref<32x128xf32, #tpu.memory_space<vmem>>, vector<8x128xf32>,
    return
  }
  func.func @transform_1(%arg0: i32, %arg1: memref<64xi32, #tpu.memory_space<smem>>) -> (i32, i32) {
    %c0_i32 = arith.constant 0 : i32
    %c0_i32_0 = arith.constant 0 : i32
    %c0_i32_1 = arith.constant 0 : i32
    return %c0_i32, %c0_i32_0 : i32, i32
  }
  func.func @transform_2(%arg0: i32, %arg1: memref<64xi32, #tpu.memory_space<smem>>) -> (i32, i32) {
    %c0_i32 = arith.constant 0 : i32
    %c0_i32_0 = arith.constant 0 : i32
    %c0_i32_1 = arith.constant 0 : i32
    return %c0_i32, %c0_i32_0 : i32, i32
  }
  func.func @transform_3(%arg0: i32, %arg1: memref<64xi32, #tpu.memory_space<smem>>) -> (i32, i32) {
    %c0_i32 = arith.constant 0 : i32
    %c0_i32_0 = arith.constant 0 : i32
    return %arg0, %c0_i32 : i32, i32
  }
}

</mosaic_0001>

<llo_original>
// kernel: embeddings_forward.1
$region0: #{embeddings_forward.1}
  #allocation0 [shape = 'u32[]', space=smem, size = 0x4, offset = 0x4, fixed_abs, tag = 'smem constant byte address 0x4 - core index']
  #allocation1 [shape = 'u32[144,128]{1,0:T(1,128)}', space=vmem, size = 0x12000, scoped, tag = 'internal scratch']
  #allocation2 [shape = 'f32[4,8,128]{2,1,0:T(8,128)}', space=vmem, size = 0x4000, scoped, tag = 'scratch operand']
  #allocation3 [shape = 's32[4]{0}', space=sflag, size = 0x10, scoped, tag = 'scratch operand']
  #allocation4 [shape = 's32[1]{0}', space=sflag, size = 0x4, scoped, tag = 'scoped memory for embeddings_forward.1']
  #allocation5 [shape = 'u8[512]{0}', space=smem, size = 0x200, scoped, tag = 'prefetched SMEM operand 0']
  #allocation8 [shape = 's32[]', space=sflag, size = 0x4, offset = 0, fixed_abs, tag = 'sflag constant byte address 0x0 - dummy sync flag']
  #allocation9 [shape = 's32[]', space=sflag, size = 0x4, offset = 0, fixed_abs, tag = 'sflag constant byte address 0x0 - dummy sync flag']
  #allocation10 [shape = 'u32[]', space=smem, size = 0x4, offset = 0x44, fixed_abs, tag = 'smem constant byte address 0x44 - assertion arg 0']
  #allocation11 [shape = 'u32[]', space=smem, size = 0x4, offset = 0x48, fixed_abs, tag = 'smem constant byte address 0x48 - assertion arg 1']
  #allocation12 [shape = 's32[]', space=sflag, size = 0x4, offset = 0, fixed_abs, tag = 'sflag constant byte address 0x0 - dummy sync flag']
  #allocation13 [shape = 's32[]', space=sflag, size = 0x4, offset = 0, fixed_abs, tag = 'sflag constant byte address 0x0 - dummy sync flag']
  #allocation14 [shape = 's32[]', space=sflag, size = 0x4, offset = 0, fixed_abs, tag = 'sflag constant byte address 0x0 - dummy sync flag']
  #allocation15 [shape = 's32[]', space=sflag, size = 0x4, offset = 0, fixed_abs, tag = 'sflag constant byte address 0x0 - dummy sync flag']
  #allocation16 [shape = 's32[]', space=sflag, size = 0x4, offset = 0, fixed_abs, tag = 'sflag constant byte address 0x0 - dummy sync flag']
  #allocation17 [shape = 's32[]', space=sflag, size = 0x4, offset = 0, fixed_abs, tag = 'sflag constant byte address 0x0 - dummy sync flag']
  #allocation18 [shape = 's32[]', space=sflag, size = 0x4, offset = 0, fixed_abs, tag = 'sflag constant byte address 0x0 - dummy sync flag']
  #allocation19 [shape = 's32[]', space=sflag, size = 0x4, offset = 0, fixed_abs, tag = 'sflag constant byte address 0x0 - dummy sync flag']
  #allocation20 [shape = 's32[]', space=sflag, size = 0x4, offset = 0, fixed_abs, tag = 'sflag constant byte address 0x0 - dummy sync flag']
  #allocation21 [shape = 's32[]', space=sflag, size = 0x4, offset = 0, fixed_abs, tag = 'sflag constant byte address 0x0 - dummy sync flag']
  #allocation22 [shape = 's32[]', space=sflag, size = 0x4, offset = 0, fixed_abs, tag = 'sflag constant byte address 0x0 - dummy sync flag']
  #allocation23 [shape = 's32[]', space=sflag, size = 0x4, offset = 0, fixed_abs, tag = 'sflag constant byte address 0x0 - dummy sync flag']
  #allocation24 [shape = 's32[]', space=sflag, size = 0x4, offset = 0, fixed_abs, tag = 'sflag constant byte address 0x0 - dummy sync flag']
  #allocation25 [shape = 's32[]', space=sflag, size = 0x4, offset = 0, fixed_abs, tag = 'sflag constant byte address 0x0 - dummy sync flag']
  #allocation26 [shape = 's32[]', space=sflag, size = 0x4, offset = 0, fixed_abs, tag = 'sflag constant byte address 0x0 - dummy sync flag']
  #allocation27 [shape = 's32[]', space=sflag, size = 0x4, offset = 0, fixed_abs, tag = 'sflag constant byte address 0x0 - dummy sync flag']
  #allocation28 [shape = 's32[]', space=sflag, size = 0x4, offset = 0, fixed_abs, tag = 'sflag constant byte address 0x0 - dummy sync flag']
  #allocation29 [shape = 's32[]', space=sflag, size = 0x4, offset = 0, fixed_abs, tag = 'sflag constant byte address 0x0 - dummy sync flag']
  #allocation30 [shape = 's32[]', space=sflag, size = 0x4, offset = 0, fixed_abs, tag = 'sflag constant byte address 0x0 - dummy sync flag']
  #allocation31 [shape = 's32[]', space=sflag, size = 0x4, offset = 0, fixed_abs, tag = 'sflag constant byte address 0x0 - dummy sync flag']
  #allocation32 [shape = 's32[]', space=sflag, size = 0x4, offset = 0, fixed_abs, tag = 'sflag constant byte address 0x0 - dummy sync flag']
  #allocation33 [shape = 's32[]', space=sflag, size = 0x4, offset = 0, fixed_abs, tag = 'sflag constant byte address 0x0 - dummy sync flag']
  #allocation34 [shape = 's32[]', space=sflag, size = 0x4, offset = 0, fixed_abs, tag = 'sflag constant byte address 0x0 - dummy sync flag']
  #allocation35 [shape = 's32[]', space=sflag, size = 0x4, offset = 0, fixed_abs, tag = 'sflag constant byte address 0x0 - dummy sync flag']
  #allocation36 [shape = 's32[]', space=sflag, size = 0x4, offset = 0, fixed_abs, tag = 'sflag constant byte address 0x0 - dummy sync flag']
  #allocation37 [shape = 's32[]', space=sflag, size = 0x4, offset = 0, fixed_abs, tag = 'sflag constant byte address 0x0 - dummy sync flag']
  #allocation38 [shape = 's32[]', space=sflag, size = 0x4, offset = 0, fixed_abs, tag = 'sflag constant byte address 0x0 - dummy sync flag']
  #allocation39 [shape = 's32[]', space=sflag, size = 0x4, offset = 0, fixed_abs, tag = 'sflag constant byte address 0x0 - dummy sync flag']
  #allocation40 [shape = 's32[]', space=sflag, size = 0x4, offset = 0, fixed_abs, tag = 'sflag constant byte address 0x0 - dummy sync flag']
  #allocation41 [shape = 's32[]', space=sflag, size = 0x4, offset = 0, fixed_abs, tag = 'sflag constant byte address 0x0 - dummy sync flag']
  #allocation42 [shape = 's32[]', space=sflag, size = 0x4, offset = 0, fixed_abs, tag = 'sflag constant byte address 0x0 - dummy sync flag']
  #allocation43 [shape = 's32[]', space=sflag, size = 0x4, offset = 0, fixed_abs, tag = 'sflag constant byte address 0x0 - dummy sync flag']
  #allocation44 [shape = 's32[]', space=sflag, size = 0x4, offset = 0, fixed_abs, tag = 'sflag constant byte address 0x0 - dummy sync flag']
  #allocation45 [shape = 's32[]', space=sflag, size = 0x4, offset = 0, fixed_abs, tag = 'sflag constant byte address 0x0 - dummy sync flag']
  #allocation46 [shape = 's32[]', space=sflag, size = 0x4, offset = 0, fixed_abs, tag = 'sflag constant byte address 0x0 - dummy sync flag']
  #allocation47 [shape = 's32[]', space=sflag, size = 0x4, offset = 0, fixed_abs, tag = 'sflag constant byte address 0x0 - dummy sync flag']
  #allocation48 [shape = 's32[]', space=sflag, size = 0x4, offset = 0, fixed_abs, tag = 'sflag constant byte address 0x0 - dummy sync flag']
  #allocation49 [shape = 's32[]', space=sflag, size = 0x4, offset = 0, fixed_abs, tag = 'sflag constant byte address 0x0 - dummy sync flag']
  #allocation50 [shape = 's32[]', space=sflag, size = 0x4, offset = 0, fixed_abs, tag = 'sflag constant byte address 0x0 - dummy sync flag']
  #allocation51 [shape = 's32[]', space=sflag, size = 0x4, offset = 0, fixed_abs, tag = 'sflag constant byte address 0x0 - dummy sync flag']
  #allocation52 [shape = 's32[]', space=sflag, size = 0x4, offset = 0, fixed_abs, tag = 'sflag constant byte address 0x0 - dummy sync flag']
  #allocation53 [shape = 's32[]', space=sflag, size = 0x4, offset = 0, fixed_abs, tag = 'sflag constant byte address 0x0 - dummy sync flag']
  #allocation54 [shape = 's32[]', space=sflag, size = 0x4, offset = 0, fixed_abs, tag = 'sflag constant byte address 0x0 - dummy sync flag']
  #allocation55 [shape = 's32[]', space=sflag, size = 0x4, offset = 0, fixed_abs, tag = 'sflag constant byte address 0x0 - dummy sync flag']
  #allocation56 [shape = 's32[]', space=sflag, size = 0x4, offset = 0, fixed_abs, tag = 'sflag constant byte address 0x0 - dummy sync flag']
  #allocation57 [shape = 's32[]', space=sflag, size = 0x4, offset = 0, fixed_abs, tag = 'sflag constant byte address 0x0 - dummy sync flag']
  #allocation58 [shape = 's32[]', space=sflag, size = 0x4, offset = 0, fixed_abs, tag = 'sflag constant byte address 0x0 - dummy sync flag']
  #allocation59 [shape = 's32[]', space=sflag, size = 0x4, offset = 0, fixed_abs, tag = 'sflag constant byte address 0x0 - dummy sync flag']
  #allocation60 [shape = 's32[]', space=sflag, size = 0x4, offset = 0, fixed_abs, tag = 'sflag constant byte address 0x0 - dummy sync flag']
  #allocation61 [shape = 's32[]', space=sflag, size = 0x4, offset = 0, fixed_abs, tag = 'sflag constant byte address 0x0 - dummy sync flag']
  #allocation62 [shape = 's32[]', space=sflag, size = 0x4, offset = 0, fixed_abs, tag = 'sflag constant byte address 0x0 - dummy sync flag']
  #allocation63 [shape = 's32[]', space=sflag, size = 0x4, offset = 0, fixed_abs, tag = 'sflag constant byte address 0x0 - dummy sync flag']
  #allocation64 [shape = 's32[]', space=sflag, size = 0x4, offset = 0, fixed_abs, tag = 'sflag constant byte address 0x0 - dummy sync flag']
  #allocation65 [shape = 's32[]', space=sflag, size = 0x4, offset = 0, fixed_abs, tag = 'sflag constant byte address 0x0 - dummy sync flag']
  #allocation66 [shape = 's32[]', space=sflag, size = 0x4, offset = 0, fixed_abs, tag = 'sflag constant byte address 0x0 - dummy sync flag']
  #allocation67 [shape = 's32[]', space=sflag, size = 0x4, offset = 0, fixed_abs, tag = 'sflag constant byte address 0x0 - dummy sync flag']
  #allocation68 [shape = 's32[]', space=sflag, size = 0x4, offset = 0, fixed_abs, tag = 'sflag constant byte address 0x0 - dummy sync flag']
  #allocation69 [shape = 's32[]', space=sflag, size = 0x4, offset = 0, fixed_abs, tag = 'sflag constant byte address 0x0 - dummy sync flag']
  #allocation70 [shape = 's32[]', space=sflag, size = 0x4, offset = 0, fixed_abs, tag = 'sflag constant byte address 0x0 - dummy sync flag']
  #allocation71 [shape = 's32[]', space=sflag, size = 0x4, offset = 0, fixed_abs, tag = 'sflag constant byte address 0x0 - dummy sync flag']
  #allocation72 [shape = 's32[]', space=sflag, size = 0x4, offset = 0, fixed_abs, tag = 'sflag constant byte address 0x0 - dummy sync flag']
  #allocation73 [shape = 's32[]', space=sflag, size = 0x4, offset = 0, fixed_abs, tag = 'sflag constant byte address 0x0 - dummy sync flag']
  %s0 = inlined_call_operand.vmem [shape: s32[64], index: 0, kind: input, shape index: {}]
  %s1 = inlined_call_operand.hbm [shape: f32[256,128], index: 1, kind: input, shape index: {}]
  %s2 = inlined_call_operand.vmem [shape: f32[1,128], index: 2, kind: input, shape index: {}]
  %s3 = inlined_call_operand.vmem [shape: f32[1,128], index: 3, kind: input, shape index: {}]
  %s4 = inlined_call_operand.hbm [shape: f32[64,128], index: 4, kind: output, shape index: {}]
  %s5 = sld [smem:[#allocation0]]
  $region169: #{embeddings_forward.1} parent=0
    _
  %s7 = ssub.s32 1, %s5
  %s8 = scalar_select 0, %s7, %s5
  %s9 = sshll.u32 %s0, 4
  %s10 = int_to_ptr.vmem [resolvable:$true] %s9
  %12 = dma.vmem_to_smem %s10, 16, [#allocation5], [#allocation4]
  %13 = dma.done [#allocation4], 16
  %14 = sfence
  $region1: #{embeddings_forward.1} parent=0
    #allocation6 [shape = 'u8[32768]{0}', space=vmem, size = 0x8000, scoped, tag = 'output window, operand 0']
    #allocation7 [shape = 's32[2]{0}', space=sflag, size = 0x8, scoped, tag = 'scoped memory for embeddings_forward.1']
    %15 = vsyncpa [#allocation7], 0
    %s16 = scalar_lea.sflag [#allocation7], 1
    %17 = vsyncpa %s16, 0
    loop: start=0, step=1, limit=4
    $region2: #{embeddings_forward.1} parent=1 // loop_pre_header
      _
    $region3: #{embeddings_forward.1} parent=1 // loop_header
      %s19 = sphi 0, %s23
      %p20 = scmp.ge.s32.totalorder %s19, 4
      %s27 = sphi 0, %s27
      %s29 = sphi 0, %s27
      %s30 = sphi 0, %s29
      %s44 = sphi 0, %s30
      %s48 = sphi 0, %s48
      %s50 = sphi 0, %s48
      %s51 = sphi 0, %s50
      %s65 = sphi 0, %s51
      %s71 = sphi 0, %s73
      %s74 = sphi 0, %s71
      %s75 = sphi 0, %s74
      %s91 = sphi 0, %s75
    $region4: #{embeddings_forward.1} parent=1 // loop_header_branch
      %22 = sbr.rel (%p20) target = $region8
    $region5: #{embeddings_forward.1} parent=1 // loop_body
      %s24 = ssub.s32 %s19, 1
      %s25 = ssub.s32 %s19, 2
      %s26 = sadd.s32 %s19, 1
      %s28 = sadd.s32 %s27, 1
      %p31 = scmp.eq.s32.totalorder %s19, 1
      %p32 = scmp.ne.s32.totalorder %s27, %s29
      %p33 = scmp.eq.s32.totalorder %s19, 0
      %p34 = por %p32, %p33
      %p35 = scmp.ne.s32.totalorder %s27, %s29
      %p36 = scmp.eq.s32.totalorder %s24, 1
      %p37 = por %p35, %p36
      %p38 = scmp.ne.s32.totalorder %s29, %s30
      %p39 = scmp.eq.s32.totalorder %s24, 0
      %p40 = por %p38, %p39
      %p41 = scmp.ne.s32.totalorder %s29, %s30
      %p42 = scmp.eq.s32.totalorder %s25, 1
      %p43 = por %p41, %p42
      %p45 = scmp.ne.s32.totalorder %s30, %s44
      %p46 = scmp.eq.s32.totalorder %s25, 0
      %p47 = por %p45, %p46
      %s49 = sadd.s32 %s48, 1
      %p52 = scmp.eq.s32.totalorder %s19, 1
      %p53 = scmp.ne.s32.totalorder %s48, %s50
      %p54 = scmp.eq.s32.totalorder %s19, 0
      %p55 = por %p53, %p54
      %p56 = scmp.ne.s32.totalorder %s48, %s50
      %p57 = scmp.eq.s32.totalorder %s24, 1
      %p58 = por %p56, %p57
      %p59 = scmp.ne.s32.totalorder %s50, %s51
      %p60 = scmp.eq.s32.totalorder %s24, 0
      %p61 = por %p59, %p60
      %p62 = scmp.ne.s32.totalorder %s50, %s51
      %p63 = scmp.eq.s32.totalorder %s25, 1
      %p64 = por %p62, %p63
      %p66 = scmp.ne.s32.totalorder %s51, %s65
      %p67 = scmp.eq.s32.totalorder %s25, 0
      %p68 = por %p66, %p67
      %s69 = ssub.s32 %s19, %s26
      %p70 = scmp.eq.s32.totalorder %s69, 0
      %s72 = sadd.s32 %s71, 1
      %s73 = scalar_select %p70, %s71, %s72
      %p76 = pneg %p70
      %p77 = scmp.eq.s32.totalorder %s19, 1
      %p78 = por %p76, %p77
      %p79 = scmp.ne.s32.totalorder %s71, %s74
      %p80 = scmp.eq.s32.totalorder %s19, 0
      %p81 = por %p79, %p80
      %p82 = scmp.ne.s32.totalorder %s71, %s74
      %p83 = scmp.eq.s32.totalorder %s24, 1
      %p84 = por %p82, %p83
      %p85 = scmp.ne.s32.totalorder %s74, %s75
      %p86 = scmp.eq.s32.totalorder %s24, 0
      %p87 = por %p85, %p86
      %p88 = scmp.ne.s32.totalorder %s74, %s75
      %p89 = scmp.eq.s32.totalorder %s25, 1
      %p90 = por %p88, %p89
      %p92 = scmp.ne.s32.totalorder %s75, %s91
      %p93 = scmp.eq.s32.totalorder %s25, 0
      %p94 = por %p92, %p93
      %p95 = scmp.le.s32.totalorder 1, %s19
      %p96 = scmp.lt.s32.totalorder %s19, 3
      %p97 = pnand %p95, %p96
      %p98 = pneg %p97
      // Predicated region
      $region9: #{embeddings_forward.1} parent=5 // pred_check
        _
      $region10: #{embeddings_forward.1} parent=5 // pred_check_branch
        %100 = sbr.rel (%p97) target = $region12
      $region11: #{embeddings_forward.1} parent=5 // pred_region
        %s101 = ssub.s32 %s19, 1
        // Predicated region
        $region13: #{embeddings_forward.1} parent=11 // pred_check
          %p102 = pneg %p40
        $region14: #{embeddings_forward.1} parent=11 // pred_check_branch
          %104 = sbr.rel (%p102) target = $region16
        $region15: #{embeddings_forward.1} parent=11 // pred_region
          _
        $region16: #{embeddings_forward.1} parent=11 // pred_fallthru
          _
        // Predicated region
        $region17: #{embeddings_forward.1} parent=11 // pred_check
          %p105 = pneg %p61
        $region18: #{embeddings_forward.1} parent=11 // pred_check_branch
          %107 = sbr.rel (%p105) target = $region20
        $region19: #{embeddings_forward.1} parent=11 // pred_region
          _
        $region20: #{embeddings_forward.1} parent=11 // pred_fallthru
          _
      $region12: #{embeddings_forward.1} parent=5 // pred_fallthru
        _
      %p108 = scmp.lt.s32.totalorder %s19, 2
      // Predicated region
      $region21: #{embeddings_forward.1} parent=5 // pred_check
        %p109 = pneg %p108
      $region22: #{embeddings_forward.1} parent=5 // pred_check_branch
        %111 = sbr.rel (%p109) target = $region24
      $region23: #{embeddings_forward.1} parent=5 // pred_region
        _
      $region24: #{embeddings_forward.1} parent=5 // pred_fallthru
        _
      %p112 = scmp.le.s32.totalorder 1, %s19
      %p113 = scmp.lt.s32.totalorder %s19, 3
      %p114 = pnand %p112, %p113
      %p115 = pneg %p114
      // Predicated region
      $region25: #{embeddings_forward.1} parent=5 // pred_check
        _
      $region26: #{embeddings_forward.1} parent=5 // pred_check_branch
        %117 = sbr.rel (%p114) target = $region28
      $region27: #{embeddings_forward.1} parent=5 // pred_region
        %s118 = ssub.s32 %s19, 1
        %p119 = pneg %p40
        %p120 = pneg %p37
        %p121 = pneg %p61
        %p122 = pneg %p58
        %p123 = pneg %p87
        %p124 = pneg %p84
        %s125 = sand.u32 %s74, 1
        %s126 = scalar_lea.sflag [#allocation7], %s125
        %s127 = sand.u32 %s74, 1
        %s128 = smul.addr %s127, 32
        %s129 = scalar_lea.vmem [#allocation6], %s128
        %s130 = smul.u32 4, %s24
        %s131 = smul.u32 %s24, 32
        %v132 = vld [vmem:[%s2] sm:$0x1]
        %v133 = vld [vmem:[%s3] sm:$0x1]
        %s134 = sld [smem:[#allocation5 + %s131]]
        %s135 = smul.addr %s134, 16
        %s136 = scalar_lea.hbm %s1, %s135
        // Predicated region
        $region29: #{embeddings_forward.1} parent=27 // pred_check
          _
        $region30: #{embeddings_forward.1} parent=27 // pred_check_branch
          %138 = sbr.rel target = $region32
        $region31: #{embeddings_forward.1} parent=27 // pred_region
          %139 = sst [smem:[#allocation10]] [#allocation9]
          %140 = sst [smem:[#allocation11]] [#allocation8]
        $region32: #{embeddings_forward.1} parent=27 // pred_fallthru
          _
        %142 = shalt.err (0)
        %s144 = sshll.u32 [#allocation2], 4
        %s145 = int_to_ptr.vmem [resolvable:$true] %s144
        %147 = dma.hbm_to_vmem [thread:$0]  %s136, 16, %s145, [#allocation3]
        %s148 = sadd.s32 %s131, 1
        %s149 = sld [smem:[#allocation5 + %s148]]
        %s150 = smul.addr %s149, 16
        %s151 = scalar_lea.hbm %s1, %s150
        %s152 = scalar_lea.vmem [#allocation2], 1
        // Predicated region
        $region33: #{embeddings_forward.1} parent=27 // pred_check
          _
        $region34: #{embeddings_forward.1} parent=27 // pred_check_branch
          %154 = sbr.rel target = $region36
        $region35: #{embeddings_forward.1} parent=27 // pred_region
          %155 = sst [smem:[#allocation10]] [#allocation13]
          %156 = sst [smem:[#allocation11]] [#allocation12]
        $region36: #{embeddings_forward.1} parent=27 // pred_fallthru
          _
        %158 = shalt.err (0)
        %s160 = sshll.u32 %s152, 4
        %s161 = int_to_ptr.vmem [resolvable:$true] %s160
        %163 = dma.hbm_to_vmem [thread:$0]  %s151, 16, %s161, [#allocation3]
        %s164 = sadd.s32 %s131, 2
        %s165 = sld [smem:[#allocation5 + %s164]]
        %s166 = smul.addr %s165, 16
        %s167 = scalar_lea.hbm %s1, %s166
        %s168 = scalar_lea.vmem [#allocation2], 2
        // Predicated region
        $region37: #{embeddings_forward.1} parent=27 // pred_check
          _
        $region38: #{embeddings_forward.1} parent=27 // pred_check_branch
          %170 = sbr.rel target = $region40
        $region39: #{embeddings_forward.1} parent=27 // pred_region
          %171 = sst [smem:[#allocation10]] [#allocation15]
          %172 = sst [smem:[#allocation11]] [#allocation14]
        $region40: #{embeddings_forward.1} parent=27 // pred_fallthru
          _
        %174 = shalt.err (0)
        %s176 = sshll.u32 %s168, 4
        %s177 = int_to_ptr.vmem [resolvable:$true] %s176
        %179 = dma.hbm_to_vmem [thread:$0]  %s167, 16, %s177, [#allocation3]
        %s180 = sadd.s32 %s131, 3
        %s181 = sld [smem:[#allocation5 + %s180]]
        %s182 = smul.addr %s181, 16
        %s183 = scalar_lea.hbm %s1, %s182
        %s184 = scalar_lea.vmem [#allocation2], 3
        // Predicated region
        $region41: #{embeddings_forward.1} parent=27 // pred_check
          _
        $region42: #{embeddings_forward.1} parent=27 // pred_check_branch
          %186 = sbr.rel target = $region44
        $region43: #{embeddings_forward.1} parent=27 // pred_region
          %187 = sst [smem:[#allocation10]] [#allocation17]
          %188 = sst [smem:[#allocation11]] [#allocation16]
        $region44: #{embeddings_forward.1} parent=27 // pred_fallthru
          _
        %190 = shalt.err (0)
        %s192 = sshll.u32 %s184, 4
        %s193 = int_to_ptr.vmem [resolvable:$true] %s192
        %195 = dma.hbm_to_vmem [thread:$0]  %s183, 16, %s193, [#allocation3]
        %s196 = sadd.s32 %s131, 4
        %s197 = sld [smem:[#allocation5 + %s196]]
        %s198 = smul.addr %s197, 16
        %s199 = scalar_lea.hbm %s1, %s198
        %s200 = scalar_lea.vmem [#allocation2], 4
        // Predicated region
        $region45: #{embeddings_forward.1} parent=27 // pred_check
          _
        $region46: #{embeddings_forward.1} parent=27 // pred_check_branch
          %202 = sbr.rel target = $region48
        $region47: #{embeddings_forward.1} parent=27 // pred_region
          %203 = sst [smem:[#allocation10]] [#allocation19]
          %204 = sst [smem:[#allocation11]] [#allocation18]
        $region48: #{embeddings_forward.1} parent=27 // pred_fallthru
          _
        %206 = shalt.err (0)
        %s208 = sshll.u32 %s200, 4
        %s209 = int_to_ptr.vmem [resolvable:$true] %s208
        %211 = dma.hbm_to_vmem [thread:$0]  %s199, 16, %s209, [#allocation3]
        %s212 = sadd.s32 %s131, 5
        %s213 = sld [smem:[#allocation5 + %s212]]
        %s214 = smul.addr %s213, 16
        %s215 = scalar_lea.hbm %s1, %s214
        %s216 = scalar_lea.vmem [#allocation2], 5
        // Predicated region
        $region49: #{embeddings_forward.1} parent=27 // pred_check
          _
        $region50: #{embeddings_forward.1} parent=27 // pred_check_branch
          %218 = sbr.rel target = $region52
        $region51: #{embeddings_forward.1} parent=27 // pred_region
          %219 = sst [smem:[#allocation10]] [#allocation21]
          %220 = sst [smem:[#allocation11]] [#allocation20]
        $region52: #{embeddings_forward.1} parent=27 // pred_fallthru
          _
        %222 = shalt.err (0)
        %s224 = sshll.u32 %s216, 4
        %s225 = int_to_ptr.vmem [resolvable:$true] %s224
        %227 = dma.hbm_to_vmem [thread:$0]  %s215, 16, %s225, [#allocation3]
        %s228 = sadd.s32 %s131, 6
        %s229 = sld [smem:[#allocation5 + %s228]]
        %s230 = smul.addr %s229, 16
        %s231 = scalar_lea.hbm %s1, %s230
        %s232 = scalar_lea.vmem [#allocation2], 6
        // Predicated region
        $region53: #{embeddings_forward.1} parent=27 // pred_check
          _
        $region54: #{embeddings_forward.1} parent=27 // pred_check_branch
          %234 = sbr.rel target = $region56
        $region55: #{embeddings_forward.1} parent=27 // pred_region
          %235 = sst [smem:[#allocation10]] [#allocation23]
          %236 = sst [smem:[#allocation11]] [#allocation22]
        $region56: #{embeddings_forward.1} parent=27 // pred_fallthru
          _
        %238 = shalt.err (0)
        %s240 = sshll.u32 %s232, 4
        %s241 = int_to_ptr.vmem [resolvable:$true] %s240
        %243 = dma.hbm_to_vmem [thread:$0]  %s231, 16, %s241, [#allocation3]
        %s244 = sadd.s32 %s131, 7
        %s245 = sld [smem:[#allocation5 + %s244]]
        %s246 = smul.addr %s245, 16
        %s247 = scalar_lea.hbm %s1, %s246
        %s248 = scalar_lea.vmem [#allocation2], 7
        // Predicated region
        $region57: #{embeddings_forward.1} parent=27 // pred_check
          _
        $region58: #{embeddings_forward.1} parent=27 // pred_check_branch
          %250 = sbr.rel target = $region60
        $region59: #{embeddings_forward.1} parent=27 // pred_region
          %251 = sst [smem:[#allocation10]] [#allocation25]
          %252 = sst [smem:[#allocation11]] [#allocation24]
        $region60: #{embeddings_forward.1} parent=27 // pred_fallthru
          _
        %254 = shalt.err (0)
        %s256 = sshll.u32 %s248, 4
        %s257 = int_to_ptr.vmem [resolvable:$true] %s256
        %259 = dma.hbm_to_vmem [thread:$0]  %s247, 16, %s257, [#allocation3]
        %s260 = sadd.s32 %s131, 8
        %s261 = sld [smem:[#allocation5 + %s260]]
        %s262 = smul.addr %s261, 16
        %s263 = scalar_lea.hbm %s1, %s262
        %s264 = scalar_lea.vmem [#allocation2], 8
        %s265 = scalar_lea.sflag [#allocation3], 1
        // Predicated region
        $region61: #{embeddings_forward.1} parent=27 // pred_check
          _
        $region62: #{embeddings_forward.1} parent=27 // pred_check_branch
          %267 = sbr.rel target = $region64
        $region63: #{embeddings_forward.1} parent=27 // pred_region
          %268 = sst [smem:[#allocation10]] [#allocation27]
          %269 = sst [smem:[#allocation11]] [#allocation26]
        $region64: #{embeddings_forward.1} parent=27 // pred_fallthru
          _
        %271 = shalt.err (0)
        %s273 = sshll.u32 %s264, 4
        %s274 = int_to_ptr.vmem [resolvable:$true] %s273
        %276 = dma.hbm_to_vmem [thread:$0]  %s263, 16, %s274, %s265
        %s277 = sadd.s32 %s131, 9
        %s278 = sld [smem:[#allocation5 + %s277]]
        %s279 = smul.addr %s278, 16
        %s280 = scalar_lea.hbm %s1, %s279
        %s281 = scalar_lea.vmem [#allocation2], 9
        // Predicated region
        $region65: #{embeddings_forward.1} parent=27 // pred_check
          _
        $region66: #{embeddings_forward.1} parent=27 // pred_check_branch
          %283 = sbr.rel target = $region68
        $region67: #{embeddings_forward.1} parent=27 // pred_region
          %284 = sst [smem:[#allocation10]] [#allocation29]
          %285 = sst [smem:[#allocation11]] [#allocation28]
        $region68: #{embeddings_forward.1} parent=27 // pred_fallthru
          _
        %287 = shalt.err (0)
        %s289 = sshll.u32 %s281, 4
        %s290 = int_to_ptr.vmem [resolvable:$true] %s289
        %292 = dma.hbm_to_vmem [thread:$0]  %s280, 16, %s290, %s265
        %s293 = sadd.s32 %s131, 10
        %s294 = sld [smem:[#allocation5 + %s293]]
        %s295 = smul.addr %s294, 16
        %s296 = scalar_lea.hbm %s1, %s295
        %s297 = scalar_lea.vmem [#allocation2], 10
        // Predicated region
        $region69: #{embeddings_forward.1} parent=27 // pred_check
          _
        $region70: #{embeddings_forward.1} parent=27 // pred_check_branch
          %299 = sbr.rel target = $region72
        $region71: #{embeddings_forward.1} parent=27 // pred_region
          %300 = sst [smem:[#allocation10]] [#allocation31]
          %301 = sst [smem:[#allocation11]] [#allocation30]
        $region72: #{embeddings_forward.1} parent=27 // pred_fallthru
          _
        %303 = shalt.err (0)
        %s305 = sshll.u32 %s297, 4
        %s306 = int_to_ptr.vmem [resolvable:$true] %s305
        %308 = dma.hbm_to_vmem [thread:$0]  %s296, 16, %s306, %s265
        %s309 = sadd.s32 %s131, 11
        %s310 = sld [smem:[#allocation5 + %s309]]
        %s311 = smul.addr %s310, 16
        %s312 = scalar_lea.hbm %s1, %s311
        %s313 = scalar_lea.vmem [#allocation2], 11
        // Predicated region
        $region73: #{embeddings_forward.1} parent=27 // pred_check
          _
        $region74: #{embeddings_forward.1} parent=27 // pred_check_branch
          %315 = sbr.rel target = $region76
        $region75: #{embeddings_forward.1} parent=27 // pred_region
          %316 = sst [smem:[#allocation10]] [#allocation33]
          %317 = sst [smem:[#allocation11]] [#allocation32]
        $region76: #{embeddings_forward.1} parent=27 // pred_fallthru
          _
        %319 = shalt.err (0)
        %s321 = sshll.u32 %s313, 4
        %s322 = int_to_ptr.vmem [resolvable:$true] %s321
        %324 = dma.hbm_to_vmem [thread:$0]  %s312, 16, %s322, %s265
        %s325 = sadd.s32 %s131, 12
        %s326 = sld [smem:[#allocation5 + %s325]]
        %s327 = smul.addr %s326, 16
        %s328 = scalar_lea.hbm %s1, %s327
        %s329 = scalar_lea.vmem [#allocation2], 12
        // Predicated region
        $region77: #{embeddings_forward.1} parent=27 // pred_check
          _
        $region78: #{embeddings_forward.1} parent=27 // pred_check_branch
          %331 = sbr.rel target = $region80
        $region79: #{embeddings_forward.1} parent=27 // pred_region
          %332 = sst [smem:[#allocation10]] [#allocation35]
          %333 = sst [smem:[#allocation11]] [#allocation34]
        $region80: #{embeddings_forward.1} parent=27 // pred_fallthru
          _
        %335 = shalt.err (0)
        %s337 = sshll.u32 %s329, 4
        %s338 = int_to_ptr.vmem [resolvable:$true] %s337
        %340 = dma.hbm_to_vmem [thread:$0]  %s328, 16, %s338, %s265
        %s341 = sadd.s32 %s131, 13
        %s342 = sld [smem:[#allocation5 + %s341]]
        %s343 = smul.addr %s342, 16
        %s344 = scalar_lea.hbm %s1, %s343
        %s345 = scalar_lea.vmem [#allocation2], 13
        // Predicated region
        $region81: #{embeddings_forward.1} parent=27 // pred_check
          _
        $region82: #{embeddings_forward.1} parent=27 // pred_check_branch
          %347 = sbr.rel target = $region84
        $region83: #{embeddings_forward.1} parent=27 // pred_region
          %348 = sst [smem:[#allocation10]] [#allocation37]
          %349 = sst [smem:[#allocation11]] [#allocation36]
        $region84: #{embeddings_forward.1} parent=27 // pred_fallthru
          _
        %351 = shalt.err (0)
        %s353 = sshll.u32 %s345, 4
        %s354 = int_to_ptr.vmem [resolvable:$true] %s353
        %356 = dma.hbm_to_vmem [thread:$0]  %s344, 16, %s354, %s265
        %s357 = sadd.s32 %s131, 14
        %s358 = sld [smem:[#allocation5 + %s357]]
        %s359 = smul.addr %s358, 16
        %s360 = scalar_lea.hbm %s1, %s359
        %s361 = scalar_lea.vmem [#allocation2], 14
        // Predicated region
        $region85: #{embeddings_forward.1} parent=27 // pred_check
          _
        $region86: #{embeddings_forward.1} parent=27 // pred_check_branch
          %363 = sbr.rel target = $region88
        $region87: #{embeddings_forward.1} parent=27 // pred_region
          %364 = sst [smem:[#allocation10]] [#allocation39]
          %365 = sst [smem:[#allocation11]] [#allocation38]
        $region88: #{embeddings_forward.1} parent=27 // pred_fallthru
          _
        %367 = shalt.err (0)
        %s369 = sshll.u32 %s361, 4
        %s370 = int_to_ptr.vmem [resolvable:$true] %s369
        %372 = dma.hbm_to_vmem [thread:$0]  %s360, 16, %s370, %s265
        %s373 = sadd.s32 %s131, 15
        %s374 = sld [smem:[#allocation5 + %s373]]
        %s375 = smul.addr %s374, 16
        %s376 = scalar_lea.hbm %s1, %s375
        %s377 = scalar_lea.vmem [#allocation2], 15
        // Predicated region
        $region89: #{embeddings_forward.1} parent=27 // pred_check
          _
        $region90: #{embeddings_forward.1} parent=27 // pred_check_branch
          %379 = sbr.rel target = $region92
        $region91: #{embeddings_forward.1} parent=27 // pred_region
          %380 = sst [smem:[#allocation10]] [#allocation41]
          %381 = sst [smem:[#allocation11]] [#allocation40]
        $region92: #{embeddings_forward.1} parent=27 // pred_fallthru
          _
        %383 = shalt.err (0)
        %s385 = sshll.u32 %s377, 4
        %s386 = int_to_ptr.vmem [resolvable:$true] %s385
        %388 = dma.hbm_to_vmem [thread:$0]  %s376, 16, %s386, %s265
        %s389 = sadd.s32 %s131, 16
        %s390 = sld [smem:[#allocation5 + %s389]]
        %s391 = smul.addr %s390, 16
        %s392 = scalar_lea.hbm %s1, %s391
        %s393 = scalar_lea.vmem [#allocation2], 16
        %s394 = scalar_lea.sflag [#allocation3], 2
        // Predicated region
        $region93: #{embeddings_forward.1} parent=27 // pred_check
          _
        $region94: #{embeddings_forward.1} parent=27 // pred_check_branch
          %396 = sbr.rel target = $region96
        $region95: #{embeddings_forward.1} parent=27 // pred_region
          %397 = sst [smem:[#allocation10]] [#allocation43]
          %398 = sst [smem:[#allocation11]] [#allocation42]
        $region96: #{embeddings_forward.1} parent=27 // pred_fallthru
          _
        %400 = shalt.err (0)
        %s402 = sshll.u32 %s393, 4
        %s403 = int_to_ptr.vmem [resolvable:$true] %s402
        %405 = dma.hbm_to_vmem [thread:$0]  %s392, 16, %s403, %s394
        %s406 = sadd.s32 %s131, 17
        %s407 = sld [smem:[#allocation5 + %s406]]
        %s408 = smul.addr %s407, 16
        %s409 = scalar_lea.hbm %s1, %s408
        %s410 = scalar_lea.vmem [#allocation2], 17
        // Predicated region
        $region97: #{embeddings_forward.1} parent=27 // pred_check
          _
        $region98: #{embeddings_forward.1} parent=27 // pred_check_branch
          %412 = sbr.rel target = $region100
        $region99: #{embeddings_forward.1} parent=27 // pred_region
          %413 = sst [smem:[#allocation10]] [#allocation45]
          %414 = sst [smem:[#allocation11]] [#allocation44]
        $region100: #{embeddings_forward.1} parent=27 // pred_fallthru
          _
        %416 = shalt.err (0)
        %s418 = sshll.u32 %s410, 4
        %s419 = int_to_ptr.vmem [resolvable:$true] %s418
        %421 = dma.hbm_to_vmem [thread:$0]  %s409, 16, %s419, %s394
        %s422 = sadd.s32 %s131, 18
        %s423 = sld [smem:[#allocation5 + %s422]]
        %s424 = smul.addr %s423, 16
        %s425 = scalar_lea.hbm %s1, %s424
        %s426 = scalar_lea.vmem [#allocation2], 18
        // Predicated region
        $region101: #{embeddings_forward.1} parent=27 // pred_check
          _
        $region102: #{embeddings_forward.1} parent=27 // pred_check_branch
          %428 = sbr.rel target = $region104
        $region103: #{embeddings_forward.1} parent=27 // pred_region
          %429 = sst [smem:[#allocation10]] [#allocation47]
          %430 = sst [smem:[#allocation11]] [#allocation46]
        $region104: #{embeddings_forward.1} parent=27 // pred_fallthru
          _
        %432 = shalt.err (0)
        %s434 = sshll.u32 %s426, 4
        %s435 = int_to_ptr.vmem [resolvable:$true] %s434
        %437 = dma.hbm_to_vmem [thread:$0]  %s425, 16, %s435, %s394
        %s438 = sadd.s32 %s131, 19
        %s439 = sld [smem:[#allocation5 + %s438]]
        %s440 = smul.addr %s439, 16
        %s441 = scalar_lea.hbm %s1, %s440
        %s442 = scalar_lea.vmem [#allocation2], 19
        // Predicated region
        $region105: #{embeddings_forward.1} parent=27 // pred_check
          _
        $region106: #{embeddings_forward.1} parent=27 // pred_check_branch
          %444 = sbr.rel target = $region108
        $region107: #{embeddings_forward.1} parent=27 // pred_region
          %445 = sst [smem:[#allocation10]] [#allocation49]
          %446 = sst [smem:[#allocation11]] [#allocation48]
        $region108: #{embeddings_forward.1} parent=27 // pred_fallthru
          _
        %448 = shalt.err (0)
        %s450 = sshll.u32 %s442, 4
        %s451 = int_to_ptr.vmem [resolvable:$true] %s450
        %453 = dma.hbm_to_vmem [thread:$0]  %s441, 16, %s451, %s394
        %s454 = sadd.s32 %s131, 20
        %s455 = sld [smem:[#allocation5 + %s454]]
        %s456 = smul.addr %s455, 16
        %s457 = scalar_lea.hbm %s1, %s456
        %s458 = scalar_lea.vmem [#allocation2], 20
        // Predicated region
        $region109: #{embeddings_forward.1} parent=27 // pred_check
          _
        $region110: #{embeddings_forward.1} parent=27 // pred_check_branch
          %460 = sbr.rel target = $region112
        $region111: #{embeddings_forward.1} parent=27 // pred_region
          %461 = sst [smem:[#allocation10]] [#allocation51]
          %462 = sst [smem:[#allocation11]] [#allocation50]
        $region112: #{embeddings_forward.1} parent=27 // pred_fallthru
          _
        %464 = shalt.err (0)
        %s466 = sshll.u32 %s458, 4
        %s467 = int_to_ptr.vmem [resolvable:$true] %s466
        %469 = dma.hbm_to_vmem [thread:$0]  %s457, 16, %s467, %s394
        %s470 = sadd.s32 %s131, 21
        %s471 = sld [smem:[#allocation5 + %s470]]
        %s472 = smul.addr %s471, 16
        %s473 = scalar_lea.hbm %s1, %s472
        %s474 = scalar_lea.vmem [#allocation2], 21
        // Predicated region
        $region113: #{embeddings_forward.1} parent=27 // pred_check
          _
        $region114: #{embeddings_forward.1} parent=27 // pred_check_branch
          %476 = sbr.rel target = $region116
        $region115: #{embeddings_forward.1} parent=27 // pred_region
          %477 = sst [smem:[#allocation10]] [#allocation53]
          %478 = sst [smem:[#allocation11]] [#allocation52]
        $region116: #{embeddings_forward.1} parent=27 // pred_fallthru
          _
        %480 = shalt.err (0)
        %s482 = sshll.u32 %s474, 4
        %s483 = int_to_ptr.vmem [resolvable:$true] %s482
        %485 = dma.hbm_to_vmem [thread:$0]  %s473, 16, %s483, %s394
        %s486 = sadd.s32 %s131, 22
        %s487 = sld [smem:[#allocation5 + %s486]]
        %s488 = smul.addr %s487, 16
        %s489 = scalar_lea.hbm %s1, %s488
        %s490 = scalar_lea.vmem [#allocation2], 22
        // Predicated region
        $region117: #{embeddings_forward.1} parent=27 // pred_check
          _
        $region118: #{embeddings_forward.1} parent=27 // pred_check_branch
          %492 = sbr.rel target = $region120
        $region119: #{embeddings_forward.1} parent=27 // pred_region
          %493 = sst [smem:[#allocation10]] [#allocation55]
          %494 = sst [smem:[#allocation11]] [#allocation54]
        $region120: #{embeddings_forward.1} parent=27 // pred_fallthru
          _
        %496 = shalt.err (0)
        %s498 = sshll.u32 %s490, 4
        %s499 = int_to_ptr.vmem [resolvable:$true] %s498
        %501 = dma.hbm_to_vmem [thread:$0]  %s489, 16, %s499, %s394
        %s502 = sadd.s32 %s131, 23
        %s503 = sld [smem:[#allocation5 + %s502]]
        %s504 = smul.addr %s503, 16
        %s505 = scalar_lea.hbm %s1, %s504
        %s506 = scalar_lea.vmem [#allocation2], 23
        // Predicated region
        $region121: #{embeddings_forward.1} parent=27 // pred_check
          _
        $region122: #{embeddings_forward.1} parent=27 // pred_check_branch
          %508 = sbr.rel target = $region124
        $region123: #{embeddings_forward.1} parent=27 // pred_region
          %509 = sst [smem:[#allocation10]] [#allocation57]
          %510 = sst [smem:[#allocation11]] [#allocation56]
        $region124: #{embeddings_forward.1} parent=27 // pred_fallthru
          _
        %512 = shalt.err (0)
        %s514 = sshll.u32 %s506, 4
        %s515 = int_to_ptr.vmem [resolvable:$true] %s514
        %517 = dma.hbm_to_vmem [thread:$0]  %s505, 16, %s515, %s394
        %s518 = sadd.s32 %s131, 24
        %s519 = sld [smem:[#allocation5 + %s518]]
        %s520 = smul.addr %s519, 16
        %s521 = scalar_lea.hbm %s1, %s520
        %s522 = scalar_lea.vmem [#allocation2], 24
        %s523 = scalar_lea.sflag [#allocation3], 3
        // Predicated region
        $region125: #{embeddings_forward.1} parent=27 // pred_check
          _
        $region126: #{embeddings_forward.1} parent=27 // pred_check_branch
          %525 = sbr.rel target = $region128
        $region127: #{embeddings_forward.1} parent=27 // pred_region
          %526 = sst [smem:[#allocation10]] [#allocation59]
          %527 = sst [smem:[#allocation11]] [#allocation58]
        $region128: #{embeddings_forward.1} parent=27 // pred_fallthru
          _
        %529 = shalt.err (0)
        %s531 = sshll.u32 %s522, 4
        %s532 = int_to_ptr.vmem [resolvable:$true] %s531
        %534 = dma.hbm_to_vmem [thread:$0]  %s521, 16, %s532, %s523
        %s535 = sadd.s32 %s131, 25
        %s536 = sld [smem:[#allocation5 + %s535]]
        %s537 = smul.addr %s536, 16
        %s538 = scalar_lea.hbm %s1, %s537
        %s539 = scalar_lea.vmem [#allocation2], 25
        // Predicated region
        $region129: #{embeddings_forward.1} parent=27 // pred_check
          _
        $region130: #{embeddings_forward.1} parent=27 // pred_check_branch
          %541 = sbr.rel target = $region132
        $region131: #{embeddings_forward.1} parent=27 // pred_region
          %542 = sst [smem:[#allocation10]] [#allocation61]
          %543 = sst [smem:[#allocation11]] [#allocation60]
        $region132: #{embeddings_forward.1} parent=27 // pred_fallthru
          _
        %545 = shalt.err (0)
        %s547 = sshll.u32 %s539, 4
        %s548 = int_to_ptr.vmem [resolvable:$true] %s547
        %550 = dma.hbm_to_vmem [thread:$0]  %s538, 16, %s548, %s523
        %s551 = sadd.s32 %s131, 26
        %s552 = sld [smem:[#allocation5 + %s551]]
        %s553 = smul.addr %s552, 16
        %s554 = scalar_lea.hbm %s1, %s553
        %s555 = scalar_lea.vmem [#allocation2], 26
        // Predicated region
        $region133: #{embeddings_forward.1} parent=27 // pred_check
          _
        $region134: #{embeddings_forward.1} parent=27 // pred_check_branch
          %557 = sbr.rel target = $region136
        $region135: #{embeddings_forward.1} parent=27 // pred_region
          %558 = sst [smem:[#allocation10]] [#allocation63]
          %559 = sst [smem:[#allocation11]] [#allocation62]
        $region136: #{embeddings_forward.1} parent=27 // pred_fallthru
          _
        %561 = shalt.err (0)
        %s563 = sshll.u32 %s555, 4
        %s564 = int_to_ptr.vmem [resolvable:$true] %s563
        %566 = dma.hbm_to_vmem [thread:$0]  %s554, 16, %s564, %s523
        %s567 = sadd.s32 %s131, 27
        %s568 = sld [smem:[#allocation5 + %s567]]
        %s569 = smul.addr %s568, 16
        %s570 = scalar_lea.hbm %s1, %s569
        %s571 = scalar_lea.vmem [#allocation2], 27
        // Predicated region
        $region137: #{embeddings_forward.1} parent=27 // pred_check
          _
        $region138: #{embeddings_forward.1} parent=27 // pred_check_branch
          %573 = sbr.rel target = $region140
        $region139: #{embeddings_forward.1} parent=27 // pred_region
          %574 = sst [smem:[#allocation10]] [#allocation65]
          %575 = sst [smem:[#allocation11]] [#allocation64]
        $region140: #{embeddings_forward.1} parent=27 // pred_fallthru
          _
        %577 = shalt.err (0)
        %s579 = sshll.u32 %s571, 4
        %s580 = int_to_ptr.vmem [resolvable:$true] %s579
        %582 = dma.hbm_to_vmem [thread:$0]  %s570, 16, %s580, %s523
        %s583 = sadd.s32 %s131, 28
        %s584 = sld [smem:[#allocation5 + %s583]]
        %s585 = smul.addr %s584, 16
        %s586 = scalar_lea.hbm %s1, %s585
        %s587 = scalar_lea.vmem [#allocation2], 28
        // Predicated region
        $region141: #{embeddings_forward.1} parent=27 // pred_check
          _
        $region142: #{embeddings_forward.1} parent=27 // pred_check_branch
          %589 = sbr.rel target = $region144
        $region143: #{embeddings_forward.1} parent=27 // pred_region
          %590 = sst [smem:[#allocation10]] [#allocation67]
          %591 = sst [smem:[#allocation11]] [#allocation66]
        $region144: #{embeddings_forward.1} parent=27 // pred_fallthru
          _
        %593 = shalt.err (0)
        %s595 = sshll.u32 %s587, 4
        %s596 = int_to_ptr.vmem [resolvable:$true] %s595
        %598 = dma.hbm_to_vmem [thread:$0]  %s586, 16, %s596, %s523
        %s599 = sadd.s32 %s131, 29
        %s600 = sld [smem:[#allocation5 + %s599]]
        %s601 = smul.addr %s600, 16
        %s602 = scalar_lea.hbm %s1, %s601
        %s603 = scalar_lea.vmem [#allocation2], 29
        // Predicated region
        $region145: #{embeddings_forward.1} parent=27 // pred_check
          _
        $region146: #{embeddings_forward.1} parent=27 // pred_check_branch
          %605 = sbr.rel target = $region148
        $region147: #{embeddings_forward.1} parent=27 // pred_region
          %606 = sst [smem:[#allocation10]] [#allocation69]
          %607 = sst [smem:[#allocation11]] [#allocation68]
        $region148: #{embeddings_forward.1} parent=27 // pred_fallthru
          _
        %609 = shalt.err (0)
        %s611 = sshll.u32 %s603, 4
        %s612 = int_to_ptr.vmem [resolvable:$true] %s611
        %614 = dma.hbm_to_vmem [thread:$0]  %s602, 16, %s612, %s523
        %s615 = sadd.s32 %s131, 30
        %s616 = sld [smem:[#allocation5 + %s615]]
        %s617 = smul.addr %s616, 16
        %s618 = scalar_lea.hbm %s1, %s617
        %s619 = scalar_lea.vmem [#allocation2], 30
        // Predicated region
        $region149: #{embeddings_forward.1} parent=27 // pred_check
          _
        $region150: #{embeddings_forward.1} parent=27 // pred_check_branch
          %621 = sbr.rel target = $region152
        $region151: #{embeddings_forward.1} parent=27 // pred_region
          %622 = sst [smem:[#allocation10]] [#allocation71]
          %623 = sst [smem:[#allocation11]] [#allocation70]
        $region152: #{embeddings_forward.1} parent=27 // pred_fallthru
          _
        %625 = shalt.err (0)
        %s627 = sshll.u32 %s619, 4
        %s628 = int_to_ptr.vmem [resolvable:$true] %s627
        %630 = dma.hbm_to_vmem [thread:$0]  %s618, 16, %s628, %s523
        %s631 = sadd.s32 %s131, 31
        %s632 = sld [smem:[#allocation5 + %s631]]
        %s633 = smul.addr %s632, 16
        %s634 = scalar_lea.hbm %s1, %s633
        %s635 = scalar_lea.vmem [#allocation2], 31
        // Predicated region
        $region153: #{embeddings_forward.1} parent=27 // pred_check
          _
        $region154: #{embeddings_forward.1} parent=27 // pred_check_branch
          %637 = sbr.rel target = $region156
        $region155: #{embeddings_forward.1} parent=27 // pred_region
          %638 = sst [smem:[#allocation10]] [#allocation73]
          %639 = sst [smem:[#allocation11]] [#allocation72]
        $region156: #{embeddings_forward.1} parent=27 // pred_fallthru
          _
        %641 = shalt.err (0)
        %s643 = sshll.u32 %s635, 4
        %s644 = int_to_ptr.vmem [resolvable:$true] %s643
        %646 = dma.hbm_to_vmem [thread:$0]  %s634, 16, %s644, %s523
        %s647 = smul.u32 8, 1
        %s648 = sshll.u32 %s647, 4
        %649 = dma.done [#allocation3], %s648
        %v650 = vld [vmem:[#allocation2] sm:$0xff]
        %651 = vadd.xlane.f32.xlu0 %v650
        %v652 = vpop.xlane.xlu0 %651
        %v653 = vmul.f32 %v650, %v650
        %654 = vadd.xlane.f32.xlu0 %v653
        %v655 = vpop.xlane.xlu0 %654
        %v656 = vmul.f32 %v652, 0.0078125
        %v657 = vmul.f32 %v655, 0.0078125
        %v658 = vmul.f32 %v656, %v656
        %v659 = vsub.f32 %v657, %v658
        %v660 = vmax.f32 %v659, 0.0
        %v661 = vadd.f32 %v660, 1e-12
        %v662 = vrsqrt.pop %v661
        %v663 = vsub.f32 %v650, %v656
        %v664 = vmul.f32 %v663, %v662
        %v666 = vlaneseq
        %v667 = vshrl.u32 %v666, 7
        %v668 = vsub.s32 0, %v667
        %v669 = vrot.slane %v132, %v668
        %v671 = vmul.f32 %v664, %v669
        %v673 = vlaneseq
        %v674 = vshrl.u32 %v673, 7
        %v675 = vsub.s32 0, %v674
        %v676 = vrot.slane %v133, %v675
        %v678 = vadd.f32 %v671, %v676
        %679 = vst [vmem:[%s129] sm:$0xff] %v678
        %s680 = sshll.u32 %s647, 4
        %681 = dma.done %s265, %s680
        %v682 = vld [vmem:[%s264] sm:$0xff]
        %683 = vadd.xlane.f32.xlu0 %v682
        %v684 = vpop.xlane.xlu0 %683
        %v685 = vmul.f32 %v682, %v682
        %686 = vadd.xlane.f32.xlu0 %v685
        %v687 = vpop.xlane.xlu0 %686
        %v688 = vmul.f32 %v684, 0.0078125
        %v689 = vmul.f32 %v687, 0.0078125
        %v690 = vmul.f32 %v688, %v688
        %v691 = vsub.f32 %v689, %v690
        %v692 = vmax.f32 %v691, 0.0
        %v693 = vadd.f32 %v692, 1e-12
        %v694 = vrsqrt.pop %v693
        %v695 = vsub.f32 %v682, %v688
        %v696 = vmul.f32 %v695, %v694
        %v697 = vmul.f32 %v696, %v669
        %v698 = vadd.f32 %v697, %v676
        %699 = vst [vmem:[%s129 + $0x8] sm:$0xff] %v698
        %s700 = sshll.u32 %s647, 4
        %701 = dma.done %s394, %s700
        %v702 = vld [vmem:[%s393] sm:$0xff]
        %703 = vadd.xlane.f32.xlu0 %v702
        %v704 = vpop.xlane.xlu0 %703
        %v705 = vmul.f32 %v702, %v702
        %706 = vadd.xlane.f32.xlu0 %v705
        %v707 = vpop.xlane.xlu0 %706
        %v708 = vmul.f32 %v704, 0.0078125
        %v709 = vmul.f32 %v707, 0.0078125
        %v710 = vmul.f32 %v708, %v708
        %v711 = vsub.f32 %v709, %v710
        %v712 = vmax.f32 %v711, 0.0
        %v713 = vadd.f32 %v712, 1e-12
        %v714 = vrsqrt.pop %v713
        %v715 = vsub.f32 %v702, %v708
        %v716 = vmul.f32 %v715, %v714
        %v717 = vmul.f32 %v716, %v669
        %v718 = vadd.f32 %v717, %v676
        %719 = vst [vmem:[%s129 + $0x10] sm:$0xff] %v718
        %s720 = sshll.u32 %s647, 4
        %721 = dma.done %s523, %s720
        %v722 = vld [vmem:[%s522] sm:$0xff]
        %723 = vadd.xlane.f32.xlu0 %v722
        %v724 = vpop.xlane.xlu0 %723
        %v725 = vmul.f32 %v722, %v722
        %726 = vadd.xlane.f32.xlu0 %v725
        %v727 = vpop.xlane.xlu0 %726
        %v728 = vmul.f32 %v724, 0.0078125
        %v729 = vmul.f32 %v727, 0.0078125
        %v730 = vmul.f32 %v728, %v728
        %v731 = vsub.f32 %v729, %v730
        %v732 = vmax.f32 %v731, 0.0
        %v733 = vadd.f32 %v732, 1e-12
        %v734 = vrsqrt.pop %v733
        %v735 = vsub.f32 %v722, %v728
        %v736 = vmul.f32 %v735, %v734
        %v737 = vmul.f32 %v736, %v669
        %v738 = vadd.f32 %v737, %v676
        %739 = vst [vmem:[%s129 + $0x18] sm:$0xff] %v738
        %s740 = sand.u32 %s74, 1
        %s741 = scalar_lea.sflag [#allocation7], %s740
        %s742 = sand.u32 %s74, 1
        %s743 = smul.addr %s742, 32
        %s744 = scalar_lea.vmem [#allocation6], %s743
        // Predicated region
        $region157: #{embeddings_forward.1} parent=27 // pred_check
          %p745 = pneg %p84
        $region158: #{embeddings_forward.1} parent=27 // pred_check_branch
          %747 = sbr.rel (%p745) target = $region160
        $region159: #{embeddings_forward.1} parent=27 // pred_region
          %s748 = smul.u32 4, %s24
          %s750 = ssub.s32 512, 512
          %751 = vsyncadd %s741, %s750
          %s752 = smul.addr %s748, 128
          %s753 = scalar_lea.hbm %s4, %s752
          %s754 = sshll.u32 %s744, 4
          %s755 = int_to_ptr.vmem [resolvable:$true] %s754
          %760 = dma.vmem_to_hbm [thread:$0]  %s755, 512, %s753, %s741, 128, 128, 8
        $region160: #{embeddings_forward.1} parent=27 // pred_fallthru
          _
      $region28: #{embeddings_forward.1} parent=5 // pred_fallthru
        _
      %p761 = scmp.le.s32.totalorder 2, %s19
      // Predicated region
      $region161: #{embeddings_forward.1} parent=5 // pred_check
        %p762 = pneg %p761
      $region162: #{embeddings_forward.1} parent=5 // pred_check_branch
        %764 = sbr.rel (%p762) target = $region164
      $region163: #{embeddings_forward.1} parent=5 // pred_region
        %s765 = ssub.s32 %s19, 2
        // Predicated region
        $region165: #{embeddings_forward.1} parent=163 // pred_check
          %p766 = pneg %p90
        $region166: #{embeddings_forward.1} parent=163 // pred_check_branch
          %768 = sbr.rel (%p766) target = $region168
        $region167: #{embeddings_forward.1} parent=163 // pred_region
          %s769 = sand.u32 %s75, 1
          %s770 = scalar_lea.sflag [#allocation7], %s769
          %s771 = sand.u32 %s75, 1
          %s772 = smul.addr %s771, 32
          %s773 = scalar_lea.vmem [#allocation6], %s772
          %774 = dma.done %s770, 512
        $region168: #{embeddings_forward.1} parent=163 // pred_fallthru
          _
      $region164: #{embeddings_forward.1} parent=5 // pred_fallthru
        _
    $region6: #{embeddings_forward.1} parent=1 // loop_footer
      %s23 = sadd.s32 1, %s19
    $region7: #{embeddings_forward.1} parent=1 // loop_footer_branch
      %18 = sbr.rel target = $region3
    $region8: #{embeddings_forward.1} parent=1 // loop_exit
      _
    %775 = vsyncpa [#allocation7], 1
    %s776 = scalar_lea.sflag [#allocation7], 1
    %777 = vsyncpa %s776, 1
  %778 = vsyncmov [#allocation3]
  %s779 = vpop.sfrf %778
  %p780 = scmp.eq.s32.totalorder %s779, 0
  %p781 = pneg %p780
  %783 = shalt.err (%p781)
  %s784 = scalar_lea.sflag [#allocation3], 1
  %785 = vsyncmov %s784
  %s786 = vpop.sfrf %785
  %p787 = scmp.eq.s32.totalorder %s786, 0
  %p788 = pneg %p787
  %790 = shalt.err (%p788)
  %s791 = scalar_lea.sflag [#allocation3], 2
  %792 = vsyncmov %s791
  %s793 = vpop.sfrf %792
  %p794 = scmp.eq.s32.totalorder %s793, 0
  %p795 = pneg %p794
  %797 = shalt.err (%p795)
  %s798 = scalar_lea.sflag [#allocation3], 3
  %799 = vsyncmov %s798
  %s800 = vpop.sfrf %799
  %p801 = scmp.eq.s32.totalorder %s800, 0
  %p802 = pneg %p801
  %804 = shalt.err (%p802)

</llo_original>
